<compile_context>
chip_gen: v5e
topology: v5e:2x2
jax: 0.10.0
libtpu: 0.0.40
codegen_flags: <defaults>
</compile_context>

<pallas_src>
import functools

import jax
import jax.numpy as jnp
from jax.experimental import pallas as pl
from jax.experimental.pallas import tpu as pltpu

EPS = 1e-5
_VMEM_LIMIT = 32 * 1024 * 1024


# ---------------------------------------------------------------------------
# kernels
# ---------------------------------------------------------------------------
def _conv_block_kernel(apply_affine_relu, *refs):
    """One batch element: [optional fused BN-scale/shift + ReLU] -> 3x3 conv
    (3 banded row-slab matmuls) -> raw conv output + BN statistics.

    refs (apply_affine_relu=False):  x, wt, y, sum, sumsq, xp_scratch
    refs (apply_affine_relu=True):   x, scale, shift, wt, y, sum, sumsq, xp_scratch
      x   : (1, H, W*Ci)        activation, (x, channel) on the lane axis
      wt  : (3, W*Ci, W*Co)     banded (block-Toeplitz) conv weight per dy tap
      y   : (1, H, W*Co)        raw (pre-BN) conv output
      sum / sumsq : (1, W*Co)   per-(x, c) running sums over (n, y)  [revisited]
      xp_scratch  : (H+2, W*Ci) H-halo padded copy (only 2 halo rows zeroed)
    """
    if apply_affine_relu:
        x_ref, sc_ref, sh_ref, wt_ref, y_ref, s_ref, ss_ref, xp_ref = refs
    else:
        x_ref, wt_ref, y_ref, s_ref, ss_ref, xp_ref = refs
        sc_ref = sh_ref = None

    n = pl.program_id(0)
    H = x_ref.shape[1]
    w_in = x_ref.shape[2]
    w_out = y_ref.shape[2]

    src = x_ref[0]
    if apply_affine_relu:
        # fused training-mode BN (pre-folded scale/shift) + ReLU
        src = jnp.maximum(src * sc_ref[...] + sh_ref[...], 0.0)

    # halo-only padding along H (W padding lives inside the banded weight)
    zrow = jnp.zeros((1, w_in), jnp.float32)
    xp_ref[0:1, :] = zrow
    xp_ref[H + 1:H + 2, :] = zrow
    xp_ref[1:H + 1, :] = src

    # 3 fat matmuls: (H, W*Ci) @ (W*Ci, W*Co), one per dy tap
    acc = jnp.zeros((H, w_out), jnp.float32)
    for dy in range(3):
        acc = acc + jnp.dot(xp_ref[dy:dy + H, :], wt_ref[dy],
                            preferred_element_type=jnp.float32)
    y_ref[0] = acc

    # BN statistics via ones-vector matmuls (MXU), accumulated across the batch
    ones_row = jnp.ones((1, H), jnp.float32)
    srow = jnp.dot(ones_row, acc, preferred_element_type=jnp.float32)
    ssrow = jnp.dot(ones_row, acc * acc, preferred_element_type=jnp.float32)

    @pl.when(n == 0)
    def _():
        s_ref[...] = jnp.zeros_like(s_ref)
        ss_ref[...] = jnp.zeros_like(ss_ref)

    s_ref[...] += srow
    ss_ref[...] += ssrow


def _finalize_kernel(has_proj, *refs):
    """BN2 (folded scale/shift) + ReLU + residual add for one batch element.

    refs (has_proj=True):  y2, scale, shift, x, wr_blockdiag, br_row, out
    refs (has_proj=False): y2, scale, shift, x, out   (Identity residual)
    """
    if has_proj:
        y2_ref, sc_ref, sh_ref, x_ref, wrt_ref, br_ref, out_ref = refs
    else:
        y2_ref, sc_ref, sh_ref, x_ref, out_ref = refs

    o = jnp.maximum(y2_ref[0] * sc_ref[...] + sh_ref[...], 0.0)
    if has_proj:
        o = o + jnp.dot(x_ref[0], wrt_ref[...],
                        preferred_element_type=jnp.float32) + br_ref[...]
    else:
        o = o + x_ref[0]          # Identity residual: no matmul, no weight DMA
    out_ref[0] = o


# ---------------------------------------------------------------------------
# host-side (trace-time) helpers
# ---------------------------------------------------------------------------
def _banded_conv_weight(w_hwio, W):
    """(kh, kw, Ci, Co) -> (kh, W*Ci, W*Co): fold the kw taps and the
    width-direction zero padding (padding=kw//2) into one matmul operand."""
    kh, kw, ci, co = w_hwio.shape
    xi = jnp.arange(W)[:, None]
    xo = jnp.arange(W)[None, :]
    tap = xi - xo + kw // 2                          # which kw tap couples xi -> xo
    valid = ((tap >= 0) & (tap < kw)).astype(jnp.float32)
    tap = jnp.clip(tap, 0, kw - 1)
    blk = w_hwio[:, tap] * valid[None, :, :, None, None]   # (kh, W, W, Ci, Co)
    return blk.transpose(0, 1, 3, 2, 4).reshape(kh, W * ci, W * co)


def _bn_fold(sum_row, sumsq_row, gamma, beta, count, W, C):
    """Per-channel training-mode BN folded into lane-tiled (scale, shift)."""
    s = sum_row.reshape(W, C).sum(axis=0)
    ss = sumsq_row.reshape(W, C).sum(axis=0)
    mean = s / count
    var = ss / count - mean * mean                   # biased variance (training BN)
    scale = gamma.astype(jnp.float32) * jax.lax.rsqrt(var + EPS)
    shift = beta.astype(jnp.float32) - mean * scale
    return (jnp.tile(scale, W).reshape(1, W * C),
            jnp.tile(shift, W).reshape(1, W * C))


# ---------------------------------------------------------------------------
# public wrapper
# ---------------------------------------------------------------------------
@jax.jit
def residual_block_2d(x_nchw, params):
    """Forward pass of ResidualBlock2D.  x_nchw: (N, Cin, H, W) float32."""
    N, Cin, H, W = x_nchw.shape
    Cout = params["w1"].shape[0]
    w_ci, w_co = W * Cin, W * Cout
    count = N * H * W
    has_proj = "wr" in params                        # Cin != Cout -> 1x1 projection

    # (N, Cin, H, W) -> (N, H, W*Cin): channel fastest on the lane axis.
    # TODO(synk): accept/emit NHWC directly to avoid this wrapper-side transpose.
    x2d = jnp.transpose(x_nchw, (0, 2, 3, 1)).reshape(N, H, w_ci).astype(jnp.float32)

    # OIHW -> HWIO -> banded row-matmul weights.  Conv biases b1/b2 are dropped:
    # a bias added before training-mode BN is exactly cancelled by the mean.
    wt1 = _banded_conv_weight(
        jnp.transpose(params["w1"], (2, 3, 1, 0)).astype(jnp.float32), W)
    wt2 = _banded_conv_weight(
        jnp.transpose(params["w2"], (2, 3, 1, 0)).astype(jnp.float32), W)

    cparams_acc = pltpu.CompilerParams(
        dimension_semantics=("arbitrary",), vmem_limit_bytes=_VMEM_LIMIT)
    cparams_par = pltpu.CompilerParams(
        dimension_semantics=("parallel",), vmem_limit_bytes=_VMEM_LIMIT)

    row_spec = pl.BlockSpec((1, w_co), lambda n: (0, 0))
    act_spec = lambda width: pl.BlockSpec((1, H, width), lambda n: (n, 0, 0))

    # ---- pass 1: conv1 (raw) + BN1 statistics -------------------------------
    y1_raw, s1, ss1 = pl.pallas_call(
        functools.partial(_conv_block_kernel, False),
        out_shape=(jax.ShapeDtypeStruct((N, H, w_co), jnp.float32),
                   jax.ShapeDtypeStruct((1, w_co), jnp.float32),
                   jax.ShapeDtypeStruct((1, w_co), jnp.float32)),
        grid=(N,),
        in_specs=[act_spec(w_ci),
                  pl.BlockSpec((3, w_ci, w_co), lambda n: (0, 0, 0))],
        out_specs=(act_spec(w_co), row_spec, row_spec),
        scratch_shapes=[pltpu.VMEM((H + 2, w_ci), jnp.float32)],
        compiler_params=cparams_acc,
    )(x2d, wt1)
    sc1, sh1 = _bn_fold(s1, ss1, params["g1"], params["bt1"], count, W, Cout)

    # ---- pass 2: BN1 + ReLU -> conv2 (raw) + BN2 statistics ------------------
    y2_raw, s2, ss2 = pl.pallas_call(
        functools.partial(_conv_block_kernel, True),
        out_shape=(jax.ShapeDtypeStruct((N, H, w_co), jnp.float32),
                   jax.ShapeDtypeStruct((1, w_co), jnp.float32),
                   jax.ShapeDtypeStruct((1, w_co), jnp.float32)),
        grid=(N,),
        in_specs=[act_spec(w_co), row_spec, row_spec,
                  pl.BlockSpec((3, w_co, w_co), lambda n: (0, 0, 0))],
        out_specs=(act_spec(w_co), row_spec, row_spec),
        scratch_shapes=[pltpu.VMEM((H + 2, w_co), jnp.float32)],
        compiler_params=cparams_acc,
    )(y1_raw, sc1, sh1, wt2)
    sc2, sh2 = _bn_fold(s2, ss2, params["g2"], params["bt2"], count, W, Cout)

    # ---- pass 3: BN2 + ReLU + residual ---------------------------------------
    if has_proj:
        wr = jnp.transpose(params["wr"][:, :, 0, 0], (1, 0)).astype(jnp.float32)
        wrt = (jnp.eye(W, dtype=jnp.float32)[:, None, :, None]
               * wr[None, :, None, :]).reshape(w_ci, w_co)   # block-diag 1x1 conv
        br_row = jnp.tile(params["br"].astype(jnp.float32), W).reshape(1, w_co)
        out3d = pl.pallas_call(
            functools.partial(_finalize_kernel, True),
            out_shape=jax.ShapeDtypeStruct((N, H, w_co), jnp.float32),
            grid=(N,),
            in_specs=[act_spec(w_co), row_spec, row_spec, act_spec(w_ci),
                      pl.BlockSpec((w_ci, w_co), lambda n: (0, 0)), row_spec],
            out_specs=act_spec(w_co),
            compiler_params=cparams_par,
        )(y2_raw, sc2, sh2, x2d, wrt, br_row)
    else:
        out3d = pl.pallas_call(
            functools.partial(_finalize_kernel, False),
            out_shape=jax.ShapeDtypeStruct((N, H, w_co), jnp.float32),
            grid=(N,),
            in_specs=[act_spec(w_co), row_spec, row_spec, act_spec(w_ci)],
            out_specs=act_spec(w_co),
            compiler_params=cparams_par,
        )(y2_raw, sc2, sh2, x2d)

    return jnp.transpose(out3d.reshape(N, H, W, Cout), (0, 3, 1, 2))


# ---------------------------------------------------------------------------
# plain-JAX reference (NCHW, mirrors the PyTorch module in training mode)
# ---------------------------------------------------------------------------
def _ref_forward(x, params):
    def conv(x, w, b, pad):
        y = jax.lax.conv_general_dilated(
            x, w, (1, 1), [(pad, pad), (pad, pad)],
            dimension_numbers=("NCHW", "OIHW", "NCHW"))
        return y + b[None, :, None, None]

    def bn_relu(y, g, bt):
        mean = jnp.mean(y, axis=(0, 2, 3), keepdims=True)
        var = jnp.mean((y - mean) ** 2, axis=(0, 2, 3), keepdims=True)
        yh = (y - mean) * jax.lax.rsqrt(var + EPS)
        yh = yh * g[None, :, None, None] + bt[None, :, None, None]
        return jnp.maximum(yh, 0.0)

    y = bn_relu(conv(x, params["w1"], params["b1"], 1), params["g1"], params["bt1"])
    y = bn_relu(conv(y, params["w2"], params["b2"], 1), params["g2"], params["bt2"])
    res = conv(x, params["wr"], params["br"], 0) if "wr" in params else x
    return y + res


def _make_params(key, cin, cout):
    ks = jax.random.split(key, 10)
    p = {
        "w1": 0.2 * jax.random.normal(ks[0], (cout, cin, 3, 3), jnp.float32),
        "b1": 0.1 * jax.random.normal(ks[1], (cout,), jnp.float32),
        "g1": 1.0 + 0.1 * jax.random.normal(ks[2], (cout,), jnp.float32),
        "bt1": 0.1 * jax.random.normal(ks[3], (cout,), jnp.float32),
        "w2": 0.2 * jax.random.normal(ks[4], (cout, cout, 3, 3), jnp.float32),
        "b2": 0.1 * jax.random.normal(ks[5], (cout,), jnp.float32),
        "g2": 1.0 + 0.1 * jax.random.normal(ks[6], (cout,), jnp.float32),
        "bt2": 0.1 * jax.random.normal(ks[7], (cout,), jnp.float32),
    }
    if cin != cout:
        p["wr"] = 0.2 * jax.random.normal(ks[8], (cout, cin, 1, 1), jnp.float32)
        p["br"] = 0.1 * jax.random.normal(ks[9], (cout,), jnp.float32)
    return p


if __name__ == "__main__":
    key = jax.random.PRNGKey(0)
    k_p, k_i, kx1, kx2 = jax.random.split(key, 4)

    # case 1: Cin != Cout  (1x1 projection residual)
    N, Cin, Cout, H, W = 2, 4, 8, 16, 16
    params = _make_params(k_p, Cin, Cout)
    x = jax.random.normal(kx1, (N, Cin, H, W), jnp.float32)
    out = residual_block_2d(x, params)
    jax.block_until_ready(out)
    ref = _ref_forward(x, params)
    assert out.shape == (N, Cout, H, W)
    assert jnp.allclose(out, ref, atol=1e-4, rtol=1e-4), (
        float(jnp.max(jnp.abs(out - ref))))

    # case 2: Cin == Cout  (Identity residual -> projection path skipped)
    params_id = _make_params(k_i, Cout, Cout)
    x_id = jax.random.normal(kx2, (N, Cout, H, W), jnp.float32)
    out_id = residual_block_2d(x_id, params_id)
    jax.block_until_ready(out_id)
    ref_id = _ref_forward(x_id, params_id)
    assert jnp.allclose(out_id, ref_id, atol=1e-4, rtol=1e-4), (
        float(jnp.max(jnp.abs(out_id - ref_id))))

    print("KERNEL_OK")
</pallas_src>

<mosaic_0001>
module attributes {stable_mosaic.version = 11 : i64} {
  func.func @_conv_block_kernel(%arg0: i32, %arg1: memref<1x16x64xf32, #tpu.memory_space<vmem>>, %arg2: memref<3x64x128xf32, #tpu.memory_space<vmem>>, %arg3: memref<1x16x128xf32, #tpu.memory_space<vmem>>, %arg4: memref<1x128xf32, #tpu.memory_space<vmem>>, %arg5: memref<1x128xf32, #tpu.memory_space<vmem>>, %arg6: memref<18x64xf32, #tpu.memory_space<vmem>>) attributes {dimension_semantics = [#tpu.dimension_semantics<arbitrary>], iteration_bounds = array<i64: 2>, scalar_prefetch = 0 : i64, scratch_operands = 1 : i64, tpu.core_type = #tpu.core_type<tc>, window_params = [{transform_indices = @transform_0, window_bounds = array<i64: 1, 16, 64>}, {pipeline_mode = #tpu.pipeline_mode<synchronous>, transform_indices = @transform_1, window_bounds = array<i64: 3, 64, 128>}, {transform_indices = @transform_2, window_bounds = array<i64: 1, 16, 128>}, {pipeline_mode = #tpu.pipeline_mode<synchronous>, transform_indices = @transform_3, window_bounds = array<i64: 1, 128>}, {pipeline_mode = #tpu.pipeline_mode<synchronous>, transform_indices = @transform_4, window_bounds = array<i64: 1, 128>}]} {
    %c0 = arith.constant 0 : index
    %c0_0 = arith.constant 0 : index
    %c0_1 = arith.constant 0 : index
    %0 = vector.load %arg1[%c0, %c0_0, %c0_1] : memref<1x16x64xf32, #tpu.memory_space<vmem>>, vector<1x16x64xf32>
    %1 = vector.shape_cast %0 : vector<1x16x64xf32> to vector<16x64xf32>
    %cst = arith.constant 0.000000e+00 : f32
    %2 = vector.broadcast %cst : f32 to vector<1x64xf32>
    %c0_2 = arith.constant 0 : index
    %c0_3 = arith.constant 0 : index
    %3 = vector.load %arg6[%c0_2, %c0_3] : memref<18x64xf32, #tpu.memory_space<vmem>>, vector<1x64xf32>
    tpu.vector_store %arg6[%c0_2, %c0_3], %2 {strides = array<i32>} : memref<18x64xf32, #tpu.memory_space<vmem>>, vector<1x64xf32>,
    %c17 = arith.constant 17 : index
    %c0_4 = arith.constant 0 : index
    %4 = vector.load %arg6[%c17, %c0_4] : memref<18x64xf32, #tpu.memory_space<vmem>>, vector<1x64xf32>
    tpu.vector_store %arg6[%c17, %c0_4], %2 {strides = array<i32>} : memref<18x64xf32, #tpu.memory_space<vmem>>, vector<1x64xf32>,
    %c1 = arith.constant 1 : index
    %c0_5 = arith.constant 0 : index
    %5 = vector.load %arg6[%c1, %c0_5] : memref<18x64xf32, #tpu.memory_space<vmem>>, vector<16x64xf32>
    tpu.vector_store %arg6[%c1, %c0_5], %1 {strides = array<i32>} : memref<18x64xf32, #tpu.memory_space<vmem>>, vector<16x64xf32>,
    %cst_6 = arith.constant 0.000000e+00 : f32
    %6 = vector.broadcast %cst_6 : f32 to vector<16x128xf32>
    %c0_7 = arith.constant 0 : index
    %c0_8 = arith.constant 0 : index
    %7 = vector.load %arg6[%c0_7, %c0_8] : memref<18x64xf32, #tpu.memory_space<vmem>>, vector<16x64xf32>
    %c0_9 = arith.constant 0 : index
    %c0_10 = arith.constant 0 : index
    %c0_11 = arith.constant 0 : index
    %8 = vector.load %arg2[%c0_9, %c0_10, %c0_11] : memref<3x64x128xf32, #tpu.memory_space<vmem>>, vector<1x64x128xf32>
    %9 = vector.shape_cast %8 : vector<1x64x128xf32> to vector<64x128xf32>
    %cst_12 = arith.constant dense<0.000000e+00> : vector<16x128xf32>
    %10 = tpu.matmul %7, %9, %cst_12 {dimension_numbers = #tpu.dot_dimension_numbers<[1], [0], [0], [1], [0, 0, 1, 1], [], []>} : vector<16x64xf32>, vector<64x128xf32>, vector<16x128xf32> -> vector<16x128xf32>
    %11 = arith.addf %6, %10 : vector<16x128xf32>
    %c1_13 = arith.constant 1 : index
    %c0_14 = arith.constant 0 : index
    %12 = vector.load %arg6[%c1_13, %c0_14] : memref<18x64xf32, #tpu.memory_space<vmem>>, vector<16x64xf32>
    %c1_15 = arith.constant 1 : index
    %c0_16 = arith.constant 0 : index
    %c0_17 = arith.constant 0 : index
    %13 = vector.load %arg2[%c1_15, %c0_16, %c0_17] : memref<3x64x128xf32, #tpu.memory_space<vmem>>, vector<1x64x128xf32>
    %14 = vector.shape_cast %13 : vector<1x64x128xf32> to vector<64x128xf32>
    %cst_18 = arith.constant dense<0.000000e+00> : vector<16x128xf32>
    %15 = tpu.matmul %12, %14, %cst_18 {dimension_numbers = #tpu.dot_dimension_numbers<[1], [0], [0], [1], [0, 0, 1, 1], [], []>} : vector<16x64xf32>, vector<64x128xf32>, vector<16x128xf32> -> vector<16x128xf32>
    %16 = arith.addf %11, %15 : vector<16x128xf32>
    %c2 = arith.constant 2 : index
    %c0_19 = arith.constant 0 : index
    %17 = vector.load %arg6[%c2, %c0_19] : memref<18x64xf32, #tpu.memory_space<vmem>>, vector<16x64xf32>
    %c2_20 = arith.constant 2 : index
    %c0_21 = arith.constant 0 : index
    %c0_22 = arith.constant 0 : index
    %18 = vector.load %arg2[%c2_20, %c0_21, %c0_22] : memref<3x64x128xf32, #tpu.memory_space<vmem>>, vector<1x64x128xf32>
    %19 = vector.shape_cast %18 : vector<1x64x128xf32> to vector<64x128xf32>
    %cst_23 = arith.constant dense<0.000000e+00> : vector<16x128xf32>
    %20 = tpu.matmul %17, %19, %cst_23 {dimension_numbers = #tpu.dot_dimension_numbers<[1], [0], [0], [1], [0, 0, 1, 1], [], []>} : vector<16x64xf32>, vector<64x128xf32>, vector<16x128xf32> -> vector<16x128xf32>
    %21 = arith.addf %16, %20 : vector<16x128xf32>
    %c0_24 = arith.constant 0 : index
    %c0_25 = arith.constant 0 : index
    %c0_26 = arith.constant 0 : index
    %22 = vector.load %arg3[%c0_24, %c0_25, %c0_26] : memref<1x16x128xf32, #tpu.memory_space<vmem>>, vector<1x16x128xf32>
    %23 = vector.shape_cast %22 : vector<1x16x128xf32> to vector<16x128xf32>
    %24 = vector.shape_cast %21 : vector<16x128xf32> to vector<1x16x128xf32>
    tpu.vector_store %arg3[%c0_24, %c0_25, %c0_26], %24 {strides = array<i32>} : memref<1x16x128xf32, #tpu.memory_space<vmem>>, vector<1x16x128xf32>,
    %cst_27 = arith.constant 1.000000e+00 : f32
    %25 = vector.broadcast %cst_27 : f32 to vector<1x16xf32>
    %cst_28 = arith.constant dense<0.000000e+00> : vector<1x128xf32>
    %26 = tpu.matmul %25, %21, %cst_28 {dimension_numbers = #tpu.dot_dimension_numbers<[1], [0], [0], [1], [0, 0, 1, 1], [], []>} : vector<1x16xf32>, vector<16x128xf32>, vector<1x128xf32> -> vector<1x128xf32>
    %27 = arith.mulf %21, %21 : vector<16x128xf32>
    %cst_29 = arith.constant dense<0.000000e+00> : vector<1x128xf32>
    %28 = tpu.matmul %25, %27, %cst_29 {dimension_numbers = #tpu.dot_dimension_numbers<[1], [0], [0], [1], [0, 0, 1, 1], [], []>} : vector<1x16xf32>, vector<16x128xf32>, vector<1x128xf32> -> vector<1x128xf32>
    %c0_i32 = arith.constant 0 : i32
    %29 = arith.cmpi eq, %arg0, %c0_i32 : i32
    %30 = arith.extui %29 : i1 to i32
    %c0_i32_30 = arith.constant 0 : i32
    %31 = arith.cmpi ne, %30, %c0_i32_30 : i32
    scf.if %31 {
      %cst_39 = arith.constant 0.000000e+00 : f32
      %38 = vector.broadcast %cst_39 : f32 to vector<1x128xf32>
      %c0_40 = arith.constant 0 : index
      %c0_41 = arith.constant 0 : index
      %39 = vector.load %arg4[%c0_40, %c0_41] : memref<1x128xf32, #tpu.memory_space<vmem>>, vector<1x128xf32>
      tpu.vector_store %arg4[%c0_40, %c0_41], %38 {strides = array<i32>} : memref<1x128xf32, #tpu.memory_space<vmem>>, vector<1x128xf32>,
      %cst_42 = arith.constant 0.000000e+00 : f32
      %40 = vector.broadcast %cst_42 : f32 to vector<1x128xf32>
      %c0_43 = arith.constant 0 : index
      %c0_44 = arith.constant 0 : index
      %41 = vector.load %arg5[%c0_43, %c0_44] : memref<1x128xf32, #tpu.memory_space<vmem>>, vector<1x128xf32>
      tpu.vector_store %arg5[%c0_43, %c0_44], %40 {strides = array<i32>} : memref<1x128xf32, #tpu.memory_space<vmem>>, vector<1x128xf32>,
    } else {
    }
    %c0_31 = arith.constant 0 : index
    %c0_32 = arith.constant 0 : index
    %32 = vector.load %arg4[%c0_31, %c0_32] : memref<1x128xf32, #tpu.memory_space<vmem>>, vector<1x128xf32>
    %33 = arith.addf %32, %26 : vector<1x128xf32>
    %c0_33 = arith.constant 0 : index
    %c0_34 = arith.constant 0 : index
    %34 = vector.load %arg4[%c0_33, %c0_34] : memref<1x128xf32, #tpu.memory_space<vmem>>, vector<1x128xf32>
    tpu.vector_store %arg4[%c0_33, %c0_34], %33 {strides = array<i32>} : memref<1x128xf32, #tpu.memory_space<vmem>>, vector<1x128xf32>,
    %c0_35 = arith.constant 0 : index
    %c0_36 = arith.constant 0 : index
    %35 = vector.load %arg5[%c0_35, %c0_36] : memref<1x128xf32, #tpu.memory_space<vmem>>, vector<1x128xf32>
    %36 = arith.addf %35, %28 : vector<1x128xf32>
    %c0_37 = arith.constant 0 : index
    %c0_38 = arith.constant 0 : index
    %37 = vector.load %arg5[%c0_37, %c0_38] : memref<1x128xf32, #tpu.memory_space<vmem>>, vector<1x128xf32>
    tpu.vector_store %arg5[%c0_37, %c0_38], %36 {strides = array<i32>} : memref<1x128xf32, #tpu.memory_space<vmem>>, vector<1x128xf32>,
    return
  }
  func.func @transform_0(%arg0: i32) -> (i32, i32, i32) {
    %c0_i32 = arith.constant 0 : i32
    %c0_i32_0 = arith.constant 0 : i32
    %c0_i32_1 = arith.constant 0 : i32
    return %arg0, %c0_i32, %c0_i32_0 : i32, i32, i32
  }
  func.func @transform_1(%arg0: i32) -> (i32, i32, i32) {
    %c0_i32 = arith.constant 0 : i32
    %c0_i32_0 = arith.constant 0 : i32
    %c0_i32_1 = arith.constant 0 : i32
    %c0_i32_2 = arith.constant 0 : i32
    return %c0_i32, %c0_i32_0, %c0_i32_1 : i32, i32, i32
  }
  func.func @transform_2(%arg0: i32) -> (i32, i32, i32) {
    %c0_i32 = arith.constant 0 : i32
    %c0_i32_0 = arith.constant 0 : i32
    %c0_i32_1 = arith.constant 0 : i32
    return %arg0, %c0_i32, %c0_i32_0 : i32, i32, i32
  }
  func.func @transform_3(%arg0: i32) -> (i32, i32) {
    %c0_i32 = arith.constant 0 : i32
    %c0_i32_0 = arith.constant 0 : i32
    %c0_i32_1 = arith.constant 0 : i32
    return %c0_i32, %c0_i32_0 : i32, i32
  }
  func.func @transform_4(%arg0: i32) -> (i32, i32) {
    %c0_i32 = arith.constant 0 : i32
    %c0_i32_0 = arith.constant 0 : i32
    %c0_i32_1 = arith.constant 0 : i32
    return %c0_i32, %c0_i32_0 : i32, i32
  }
}

module attributes {stable_mosaic.version = 11 : i64} {
  func.func @_conv_block_kernel(%arg0: i32, %arg1: memref<1x16x128xf32, #tpu.memory_space<vmem>>, %arg2: memref<1x128xf32, #tpu.memory_space<vmem>>, %arg3: memref<1x128xf32, #tpu.memory_space<vmem>>, %arg4: memref<3x128x128xf32, #tpu.memory_space<vmem>>, %arg5: memref<1x16x128xf32, #tpu.memory_space<vmem>>, %arg6: memref<1x128xf32, #tpu.memory_space<vmem>>, %arg7: memref<1x128xf32, #tpu.memory_space<vmem>>, %arg8: memref<18x128xf32, #tpu.memory_space<vmem>>) attributes {dimension_semantics = [#tpu.dimension_semantics<arbitrary>], iteration_bounds = array<i64: 2>, scalar_prefetch = 0 : i64, scratch_operands = 1 : i64, tpu.core_type = #tpu.core_type<tc>, window_params = [{transform_indices = @transform_0, window_bounds = array<i64: 1, 16, 128>}, {pipeline_mode = #tpu.pipeline_mode<synchronous>, transform_indices = @transform_1, window_bounds = array<i64: 1, 128>}, {pipeline_mode = #tpu.pipeline_mode<synchronous>, transform_indices = @transform_2, window_bounds = array<i64: 1, 128>}, {pipeline_mode = #tpu.pipeline_mode<synchronous>, transform_indices = @transform_3, window_bounds = array<i64: 3, 128, 128>}, {transform_indices = @transform_4, window_bounds = array<i64: 1, 16, 128>}, {pipeline_mode = #tpu.pipeline_mode<synchronous>, transform_indices = @transform_5, window_bounds = array<i64: 1, 128>}, {pipeline_mode = #tpu.pipeline_mode<synchronous>, transform_indices = @transform_6, window_bounds = array<i64: 1, 128>}]} {
    %c0 = arith.constant 0 : index
    %c0_0 = arith.constant 0 : index
    %c0_1 = arith.constant 0 : index
    %0 = vector.load %arg1[%c0, %c0_0, %c0_1] : memref<1x16x128xf32, #tpu.memory_space<vmem>>, vector<1x16x128xf32>
    %1 = vector.shape_cast %0 : vector<1x16x128xf32> to vector<16x128xf32>
    %c0_2 = arith.constant 0 : index
    %c0_3 = arith.constant 0 : index
    %2 = vector.load %arg2[%c0_2, %c0_3] : memref<1x128xf32, #tpu.memory_space<vmem>>, vector<1x128xf32>
    %3 = vector.broadcast %2 : vector<1x128xf32> to vector<16x128xf32>
    %4 = arith.mulf %1, %3 : vector<16x128xf32>
    %c0_4 = arith.constant 0 : index
    %c0_5 = arith.constant 0 : index
    %5 = vector.load %arg3[%c0_4, %c0_5] : memref<1x128xf32, #tpu.memory_space<vmem>>, vector<1x128xf32>
    %6 = vector.broadcast %5 : vector<1x128xf32> to vector<16x128xf32>
    %7 = arith.addf %4, %6 : vector<16x128xf32>
    %cst = arith.constant 0.000000e+00 : f32
    %8 = vector.broadcast %cst : f32 to vector<16x128xf32>
    %9 = arith.maximumf %7, %8 : vector<16x128xf32>
    %cst_6 = arith.constant 0.000000e+00 : f32
    %10 = vector.broadcast %cst_6 : f32 to vector<1x128xf32>
    %c0_7 = arith.constant 0 : index
    %c0_8 = arith.constant 0 : index
    %11 = vector.load %arg8[%c0_7, %c0_8] : memref<18x128xf32, #tpu.memory_space<vmem>>, vector<1x128xf32>
    tpu.vector_store %arg8[%c0_7, %c0_8], %10 {strides = array<i32>} : memref<18x128xf32, #tpu.memory_space<vmem>>, vector<1x128xf32>,
    %c17 = arith.constant 17 : index
    %c0_9 = arith.constant 0 : index
    %12 = vector.load %arg8[%c17, %c0_9] : memref<18x128xf32, #tpu.memory_space<vmem>>, vector<1x128xf32>
    tpu.vector_store %arg8[%c17, %c0_9], %10 {strides = array<i32>} : memref<18x128xf32, #tpu.memory_space<vmem>>, vector<1x128xf32>,
    %c1 = arith.constant 1 : index
    %c0_10 = arith.constant 0 : index
    %13 = vector.load %arg8[%c1, %c0_10] : memref<18x128xf32, #tpu.memory_space<vmem>>, vector<16x128xf32>
    tpu.vector_store %arg8[%c1, %c0_10], %9 {strides = array<i32>} : memref<18x128xf32, #tpu.memory_space<vmem>>, vector<16x128xf32>,
    %cst_11 = arith.constant 0.000000e+00 : f32
    %14 = vector.broadcast %cst_11 : f32 to vector<16x128xf32>
    %c0_12 = arith.constant 0 : index
    %c0_13 = arith.constant 0 : index
    %15 = vector.load %arg8[%c0_12, %c0_13] : memref<18x128xf32, #tpu.memory_space<vmem>>, vector<16x128xf32>
    %c0_14 = arith.constant 0 : index
    %c0_15 = arith.constant 0 : index
    %c0_16 = arith.constant 0 : index
    %16 = vector.load %arg4[%c0_14, %c0_15, %c0_16] : memref<3x128x128xf32, #tpu.memory_space<vmem>>, vector<1x128x128xf32>
    %17 = vector.shape_cast %16 : vector<1x128x128xf32> to vector<128x128xf32>
    %cst_17 = arith.constant dense<0.000000e+00> : vector<16x128xf32>
    %18 = tpu.matmul %15, %17, %cst_17 {dimension_numbers = #tpu.dot_dimension_numbers<[1], [0], [0], [1], [0, 0, 1, 1], [], []>} : vector<16x128xf32>, vector<128x128xf32>, vector<16x128xf32> -> vector<16x128xf32>
    %19 = arith.addf %14, %18 : vector<16x128xf32>
    %c1_18 = arith.constant 1 : index
    %c0_19 = arith.constant 0 : index
    %20 = vector.load %arg8[%c1_18, %c0_19] : memref<18x128xf32, #tpu.memory_space<vmem>>, vector<16x128xf32>
    %c1_20 = arith.constant 1 : index
    %c0_21 = arith.constant 0 : index
    %c0_22 = arith.constant 0 : index
    %21 = vector.load %arg4[%c1_20, %c0_21, %c0_22] : memref<3x128x128xf32, #tpu.memory_space<vmem>>, vector<1x128x128xf32>
    %22 = vector.shape_cast %21 : vector<1x128x128xf32> to vector<128x128xf32>
    %cst_23 = arith.constant dense<0.000000e+00> : vector<16x128xf32>
    %23 = tpu.matmul %20, %22, %cst_23 {dimension_numbers = #tpu.dot_dimension_numbers<[1], [0], [0], [1], [0, 0, 1, 1], [], []>} : vector<16x128xf32>, vector<128x128xf32>, vector<16x128xf32> -> vector<16x128xf32>
    %24 = arith.addf %19, %23 : vector<16x128xf32>
    %c2 = arith.constant 2 : index
    %c0_24 = arith.constant 0 : index
    %25 = vector.load %arg8[%c2, %c0_24] : memref<18x128xf32, #tpu.memory_space<vmem>>, vector<16x128xf32>
    %c2_25 = arith.constant 2 : index
    %c0_26 = arith.constant 0 : index
    %c0_27 = arith.constant 0 : index
    %26 = vector.load %arg4[%c2_25, %c0_26, %c0_27] : memref<3x128x128xf32, #tpu.memory_space<vmem>>, vector<1x128x128xf32>
    %27 = vector.shape_cast %26 : vector<1x128x128xf32> to vector<128x128xf32>
    %cst_28 = arith.constant dense<0.000000e+00> : vector<16x128xf32>
    %28 = tpu.matmul %25, %27, %cst_28 {dimension_numbers = #tpu.dot_dimension_numbers<[1], [0], [0], [1], [0, 0, 1, 1], [], []>} : vector<16x128xf32>, vector<128x128xf32>, vector<16x128xf32> -> vector<16x128xf32>
    %29 = arith.addf %24, %28 : vector<16x128xf32>
    %c0_29 = arith.constant 0 : index
    %c0_30 = arith.constant 0 : index
    %c0_31 = arith.constant 0 : index
    %30 = vector.load %arg5[%c0_29, %c0_30, %c0_31] : memref<1x16x128xf32, #tpu.memory_space<vmem>>, vector<1x16x128xf32>
    %31 = vector.shape_cast %30 : vector<1x16x128xf32> to vector<16x128xf32>
    %32 = vector.shape_cast %29 : vector<16x128xf32> to vector<1x16x128xf32>
    tpu.vector_store %arg5[%c0_29, %c0_30, %c0_31], %32 {strides = array<i32>} : memref<1x16x128xf32, #tpu.memory_space<vmem>>, vector<1x16x128xf32>,
    %cst_32 = arith.constant 1.000000e+00 : f32
    %33 = vector.broadcast %cst_32 : f32 to vector<1x16xf32>
    %cst_33 = arith.constant dense<0.000000e+00> : vector<1x128xf32>
    %34 = tpu.matmul %33, %29, %cst_33 {dimension_numbers = #tpu.dot_dimension_numbers<[1], [0], [0], [1], [0, 0, 1, 1], [], []>} : vector<1x16xf32>, vector<16x128xf32>, vector<1x128xf32> -> vector<1x128xf32>
    %35 = arith.mulf %29, %29 : vector<16x128xf32>
    %cst_34 = arith.constant dense<0.000000e+00> : vector<1x128xf32>
    %36 = tpu.matmul %33, %35, %cst_34 {dimension_numbers = #tpu.dot_dimension_numbers<[1], [0], [0], [1], [0, 0, 1, 1], [], []>} : vector<1x16xf32>, vector<16x128xf32>, vector<1x128xf32> -> vector<1x128xf32>
    %c0_i32 = arith.constant 0 : i32
    %37 = arith.cmpi eq, %arg0, %c0_i32 : i32
    %38 = arith.extui %37 : i1 to i32
    %c0_i32_35 = arith.constant 0 : i32
    %39 = arith.cmpi ne, %38, %c0_i32_35 : i32
    scf.if %39 {
      %cst_44 = arith.constant 0.000000e+00 : f32
      %46 = vector.broadcast %cst_44 : f32 to vector<1x128xf32>
      %c0_45 = arith.constant 0 : index
      %c0_46 = arith.constant 0 : index
      %47 = vector.load %arg6[%c0_45, %c0_46] : memref<1x128xf32, #tpu.memory_space<vmem>>, vector<1x128xf32>
      tpu.vector_store %arg6[%c0_45, %c0_46], %46 {strides = array<i32>} : memref<1x128xf32, #tpu.memory_space<vmem>>, vector<1x128xf32>,
      %cst_47 = arith.constant 0.000000e+00 : f32
      %48 = vector.broadcast %cst_47 : f32 to vector<1x128xf32>
      %c0_48 = arith.constant 0 : index
      %c0_49 = arith.constant 0 : index
      %49 = vector.load %arg7[%c0_48, %c0_49] : memref<1x128xf32, #tpu.memory_space<vmem>>, vector<1x128xf32>
      tpu.vector_store %arg7[%c0_48, %c0_49], %48 {strides = array<i32>} : memref<1x128xf32, #tpu.memory_space<vmem>>, vector<1x128xf32>,
    } else {
    }
    %c0_36 = arith.constant 0 : index
    %c0_37 = arith.constant 0 : index
    %40 = vector.load %arg6[%c0_36, %c0_37] : memref<1x128xf32, #tpu.memory_space<vmem>>, vector<1x128xf32>
    %41 = arith.addf %40, %34 : vector<1x128xf32>
    %c0_38 = arith.constant 0 : index
    %c0_39 = arith.constant 0 : index
    %42 = vector.load %arg6[%c0_38, %c0_39] : memref<1x128xf32, #tpu.memory_space<vmem>>, vector<1x128xf32>
    tpu.vector_store %arg6[%c0_38, %c0_39], %41 {strides = array<i32>} : memref<1x128xf32, #tpu.memory_space<vmem>>, vector<1x128xf32>,
    %c0_40 = arith.constant 0 : index
    %c0_41 = arith.constant 0 : index
    %43 = vector.load %arg7[%c0_40, %c0_41] : memref<1x128xf32, #tpu.memory_space<vmem>>, vector<1x128xf32>
    %44 = arith.addf %43, %36 : vector<1x128xf32>
    %c0_42 = arith.constant 0 : index
    %c0_43 = arith.constant 0 : index
    %45 = vector.load %arg7[%c0_42, %c0_43] : memref<1x128xf32, #tpu.memory_space<vmem>>, vector<1x128xf32>
    tpu.vector_store %arg7[%c0_42, %c0_43], %44 {strides = array<i32>} : memref<1x128xf32, #tpu.memory_space<vmem>>, vector<1x128xf32>,
    return
  }
  func.func @transform_0(%arg0: i32) -> (i32, i32, i32) {
    %c0_i32 = arith.constant 0 : i32
    %c0_i32_0 = arith.constant 0 : i32
    %c0_i32_1 = arith.constant 0 : i32
    return %arg0, %c0_i32, %c0_i32_0 : i32, i32, i32
  }
  func.func @transform_1(%arg0: i32) -> (i32, i32) {
    %c0_i32 = arith.constant 0 : i32
    %c0_i32_0 = arith.constant 0 : i32
    %c0_i32_1 = arith.constant 0 : i32
    return %c0_i32, %c0_i32_0 : i32, i32
  }
  func.func @transform_2(%arg0: i32) -> (i32, i32) {
    %c0_i32 = arith.constant 0 : i32
    %c0_i32_0 = arith.constant 0 : i32
    %c0_i32_1 = arith.constant 0 : i32
    return %c0_i32, %c0_i32_0 : i32, i32
  }
  func.func @transform_3(%arg0: i32) -> (i32, i32, i32) {
    %c0_i32 = arith.constant 0 : i32
    %c0_i32_0 = arith.constant 0 : i32
    %c0_i32_1 = arith.constant 0 : i32
    %c0_i32_2 = arith.constant 0 : i32
    return %c0_i32, %c0_i32_0, %c0_i32_1 : i32, i32, i32
  }
  func.func @transform_4(%arg0: i32) -> (i32, i32, i32) {
    %c0_i32 = arith.constant 0 : i32
    %c0_i32_0 = arith.constant 0 : i32
    %c0_i32_1 = arith.constant 0 : i32
    return %arg0, %c0_i32, %c0_i32_0 : i32, i32, i32
  }
  func.func @transform_5(%arg0: i32) -> (i32, i32) {
    %c0_i32 = arith.constant 0 : i32
    %c0_i32_0 = arith.constant 0 : i32
    %c0_i32_1 = arith.constant 0 : i32
    return %c0_i32, %c0_i32_0 : i32, i32
  }
  func.func @transform_6(%arg0: i32) -> (i32, i32) {
    %c0_i32 = arith.constant 0 : i32
    %c0_i32_0 = arith.constant 0 : i32
    %c0_i32_1 = arith.constant 0 : i32
    return %c0_i32, %c0_i32_0 : i32, i32
  }
}

module attributes {stable_mosaic.version = 11 : i64} {
  func.func @_finalize_kernel(%arg0: i32, %arg1: memref<1x16x128xf32, #tpu.memory_space<vmem>>, %arg2: memref<1x128xf32, #tpu.memory_space<vmem>>, %arg3: memref<1x128xf32, #tpu.memory_space<vmem>>, %arg4: memref<1x16x64xf32, #tpu.memory_space<vmem>>, %arg5: memref<64x128xf32, #tpu.memory_space<vmem>>, %arg6: memref<1x128xf32, #tpu.memory_space<vmem>>, %arg7: memref<1x16x128xf32, #tpu.memory_space<vmem>>) attributes {dimension_semantics = [#tpu.dimension_semantics<parallel>], iteration_bounds = array<i64: 2>, scalar_prefetch = 0 : i64, scratch_operands = 0 : i64, tpu.core_type = #tpu.core_type<tc>, window_params = [{transform_indices = @transform_0, window_bounds = array<i64: 1, 16, 128>}, {pipeline_mode = #tpu.pipeline_mode<synchronous>, transform_indices = @transform_1, window_bounds = array<i64: 1, 128>}, {pipeline_mode = #tpu.pipeline_mode<synchronous>, transform_indices = @transform_2, window_bounds = array<i64: 1, 128>}, {transform_indices = @transform_3, window_bounds = array<i64: 1, 16, 64>}, {pipeline_mode = #tpu.pipeline_mode<synchronous>, transform_indices = @transform_4, window_bounds = array<i64: 64, 128>}, {pipeline_mode = #tpu.pipeline_mode<synchronous>, transform_indices = @transform_5, window_bounds = array<i64: 1, 128>}, {transform_indices = @transform_6, window_bounds = array<i64: 1, 16, 128>}]} {
    %c0 = arith.constant 0 : index
    %c0_0 = arith.constant 0 : index
    %c0_1 = arith.constant 0 : index
    %0 = vector.load %arg1[%c0, %c0_0, %c0_1] : memref<1x16x128xf32, #tpu.memory_space<vmem>>, vector<1x16x128xf32>
    %1 = vector.shape_cast %0 : vector<1x16x128xf32> to vector<16x128xf32>
    %c0_2 = arith.constant 0 : index
    %c0_3 = arith.constant 0 : index
    %2 = vector.load %arg2[%c0_2, %c0_3] : memref<1x128xf32, #tpu.memory_space<vmem>>, vector<1x128xf32>
    %3 = vector.broadcast %2 : vector<1x128xf32> to vector<16x128xf32>
    %4 = arith.mulf %1, %3 : vector<16x128xf32>
    %c0_4 = arith.constant 0 : index
    %c0_5 = arith.constant 0 : index
    %5 = vector.load %arg3[%c0_4, %c0_5] : memref<1x128xf32, #tpu.memory_space<vmem>>, vector<1x128xf32>
    %6 = vector.broadcast %5 : vector<1x128xf32> to vector<16x128xf32>
    %7 = arith.addf %4, %6 : vector<16x128xf32>
    %cst = arith.constant 0.000000e+00 : f32
    %8 = vector.broadcast %cst : f32 to vector<16x128xf32>
    %9 = arith.maximumf %7, %8 : vector<16x128xf32>
    %c0_6 = arith.constant 0 : index
    %c0_7 = arith.constant 0 : index
    %c0_8 = arith.constant 0 : index
    %10 = vector.load %arg4[%c0_6, %c0_7, %c0_8] : memref<1x16x64xf32, #tpu.memory_space<vmem>>, vector<1x16x64xf32>
    %11 = vector.shape_cast %10 : vector<1x16x64xf32> to vector<16x64xf32>
    %c0_9 = arith.constant 0 : index
    %c0_10 = arith.constant 0 : index
    %12 = vector.load %arg5[%c0_9, %c0_10] : memref<64x128xf32, #tpu.memory_space<vmem>>, vector<64x128xf32>
    %cst_11 = arith.constant dense<0.000000e+00> : vector<16x128xf32>
    %13 = tpu.matmul %11, %12, %cst_11 {dimension_numbers = #tpu.dot_dimension_numbers<[1], [0], [0], [1], [0, 0, 1, 1], [], []>} : vector<16x64xf32>, vector<64x128xf32>, vector<16x128xf32> -> vector<16x128xf32>
    %14 = arith.addf %9, %13 : vector<16x128xf32>
    %c0_12 = arith.constant 0 : index
    %c0_13 = arith.constant 0 : index
    %15 = vector.load %arg6[%c0_12, %c0_13] : memref<1x128xf32, #tpu.memory_space<vmem>>, vector<1x128xf32>
    %16 = vector.broadcast %15 : vector<1x128xf32> to vector<16x128xf32>
    %17 = arith.addf %14, %16 : vector<16x128xf32>
    %c0_14 = arith.constant 0 : index
    %c0_15 = arith.constant 0 : index
    %c0_16 = arith.constant 0 : index
    %18 = vector.load %arg7[%c0_14, %c0_15, %c0_16] : memref<1x16x128xf32, #tpu.memory_space<vmem>>, vector<1x16x128xf32>
    %19 = vector.shape_cast %18 : vector<1x16x128xf32> to vector<16x128xf32>
    %20 = vector.shape_cast %17 : vector<16x128xf32> to vector<1x16x128xf32>
    tpu.vector_store %arg7[%c0_14, %c0_15, %c0_16], %20 {strides = array<i32>} : memref<1x16x128xf32, #tpu.memory_space<vmem>>, vector<1x16x128xf32>,
    return
  }
  func.func @transform_0(%arg0: i32) -> (i32, i32, i32) {
    %c0_i32 = arith.constant 0 : i32
    %c0_i32_0 = arith.constant 0 : i32
    %c0_i32_1 = arith.constant 0 : i32
    return %arg0, %c0_i32, %c0_i32_0 : i32, i32, i32
  }
  func.func @transform_1(%arg0: i32) -> (i32, i32) {
    %c0_i32 = arith.constant 0 : i32
    %c0_i32_0 = arith.constant 0 : i32
    %c0_i32_1 = arith.constant 0 : i32
    return %c0_i32, %c0_i32_0 : i32, i32
  }
  func.func @transform_2(%arg0: i32) -> (i32, i32) {
    %c0_i32 = arith.constant 0 : i32
    %c0_i32_0 = arith.constant 0 : i32
    %c0_i32_1 = arith.constant 0 : i32
    return %c0_i32, %c0_i32_0 : i32, i32
  }
  func.func @transform_3(%arg0: i32) -> (i32, i32, i32) {
    %c0_i32 = arith.constant 0 : i32
    %c0_i32_0 = arith.constant 0 : i32
    %c0_i32_1 = arith.constant 0 : i32
    return %arg0, %c0_i32, %c0_i32_0 : i32, i32, i32
  }
  func.func @transform_4(%arg0: i32) -> (i32, i32) {
    %c0_i32 = arith.constant 0 : i32
    %c0_i32_0 = arith.constant 0 : i32
    %c0_i32_1 = arith.constant 0 : i32
    return %c0_i32, %c0_i32_0 : i32, i32
  }
  func.func @transform_5(%arg0: i32) -> (i32, i32) {
    %c0_i32 = arith.constant 0 : i32
    %c0_i32_0 = arith.constant 0 : i32
    %c0_i32_1 = arith.constant 0 : i32
    return %c0_i32, %c0_i32_0 : i32, i32
  }
  func.func @transform_6(%arg0: i32) -> (i32, i32, i32) {
    %c0_i32 = arith.constant 0 : i32
    %c0_i32_0 = arith.constant 0 : i32
    %c0_i32_1 = arith.constant 0 : i32
    return %arg0, %c0_i32, %c0_i32_0 : i32, i32, i32
  }
}

</mosaic_0001>

<llo_original>
// kernel: residual_block_2d.3
$region0: #{residual_block_2d.3}
  #allocation0 [shape = 'u32[]', space=smem, size = 0x4, offset = 0x4, fixed_abs, tag = 'smem constant byte address 0x4 - core index']
  #allocation1 [shape = 'u32[72,128]{1,0:T(1,128)}', space=vmem, size = 0x9000, scoped, tag = 'internal scratch']
  #allocation2 [shape = 'f32[18,64]{1,0:T(8,128)}', space=vmem, size = 0x3000, scoped, tag = 'scratch operand']
  %s0 = inlined_call_operand.vmem [shape: f32[2,16,64], index: 0, kind: input, shape index: {}]
  %s1 = inlined_call_operand.vmem [shape: f32[3,64,128], index: 1, kind: input, shape index: {}]
  %s2 = inlined_call_operand.vmem [shape: f32[2,16,128], index: 2, kind: output, shape index: {0}]
  %s3 = inlined_call_operand.vmem [shape: f32[1,128], index: 3, kind: output, shape index: {1}]
  %s4 = inlined_call_operand.vmem [shape: f32[1,128], index: 4, kind: output, shape index: {2}]
  %5 = xla_tuple %s2, %s3, %s4
  %s6 = sld [smem:[#allocation0]]
  $region61: #{residual_block_2d.3} parent=0
    _
  %s8 = ssub.s32 1, %s6
  %s9 = scalar_select 0, %s8, %s6
  loop: start=0, step=1, limit=4
  $region2: #{residual_block_2d.3} parent=0 // loop_pre_header
    _
  $region3: #{residual_block_2d.3} parent=0 // loop_header
    %s11 = sphi 0, %s15
    %p12 = scmp.ge.s32.totalorder %s11, 4
    %s21 = sphi 0, %s23
    %s24 = sphi 0, %s21
    %s25 = sphi 0, %s24
    %s41 = sphi 0, %s25
    %s45 = sphi 0, %s45
    %s47 = sphi 0, %s45
    %s48 = sphi 0, %s47
    %s62 = sphi 0, %s48
    %s68 = sphi 0, %s70
    %s71 = sphi 0, %s68
    %s72 = sphi 0, %s71
    %s88 = sphi 0, %s72
    %s92 = sphi 0, %s92
    %s94 = sphi 0, %s92
    %s95 = sphi 0, %s94
    %s109 = sphi 0, %s95
    %s113 = sphi 0, %s113
    %s115 = sphi 0, %s113
    %s116 = sphi 0, %s115
    %s130 = sphi 0, %s116
  $region4: #{residual_block_2d.3} parent=0 // loop_header_branch
    %14 = sbr.rel (%p12) target = $region8
  $region5: #{residual_block_2d.3} parent=0 // loop_body
    %s16 = ssub.s32 %s11, 1
    %s17 = ssub.s32 %s11, 2
    %s18 = sadd.s32 %s11, 1
    %s19 = ssub.s32 %s11, %s18
    %p20 = scmp.eq.s32.totalorder %s19, 0
    %s22 = sadd.s32 %s21, 1
    %s23 = scalar_select %p20, %s21, %s22
    %p26 = pneg %p20
    %p27 = scmp.eq.s32.totalorder %s11, 1
    %p28 = por %p26, %p27
    %p29 = scmp.ne.s32.totalorder %s21, %s24
    %p30 = scmp.eq.s32.totalorder %s11, 0
    %p31 = por %p29, %p30
    %p32 = scmp.ne.s32.totalorder %s21, %s24
    %p33 = scmp.eq.s32.totalorder %s16, 1
    %p34 = por %p32, %p33
    %p35 = scmp.ne.s32.totalorder %s24, %s25
    %p36 = scmp.eq.s32.totalorder %s16, 0
    %p37 = por %p35, %p36
    %p38 = scmp.ne.s32.totalorder %s24, %s25
    %p39 = scmp.eq.s32.totalorder %s17, 1
    %p40 = por %p38, %p39
    %p42 = scmp.ne.s32.totalorder %s25, %s41
    %p43 = scmp.eq.s32.totalorder %s17, 0
    %p44 = por %p42, %p43
    %s46 = sadd.s32 %s45, 1
    %p49 = scmp.eq.s32.totalorder %s11, 1
    %p50 = scmp.ne.s32.totalorder %s45, %s47
    %p51 = scmp.eq.s32.totalorder %s11, 0
    %p52 = por %p50, %p51
    %p53 = scmp.ne.s32.totalorder %s45, %s47
    %p54 = scmp.eq.s32.totalorder %s16, 1
    %p55 = por %p53, %p54
    %p56 = scmp.ne.s32.totalorder %s47, %s48
    %p57 = scmp.eq.s32.totalorder %s16, 0
    %p58 = por %p56, %p57
    %p59 = scmp.ne.s32.totalorder %s47, %s48
    %p60 = scmp.eq.s32.totalorder %s17, 1
    %p61 = por %p59, %p60
    %p63 = scmp.ne.s32.totalorder %s48, %s62
    %p64 = scmp.eq.s32.totalorder %s17, 0
    %p65 = por %p63, %p64
    %s66 = ssub.s32 %s11, %s18
    %p67 = scmp.eq.s32.totalorder %s66, 0
    %s69 = sadd.s32 %s68, 1
    %s70 = scalar_select %p67, %s68, %s69
    %p73 = pneg %p67
    %p74 = scmp.eq.s32.totalorder %s11, 1
    %p75 = por %p73, %p74
    %p76 = scmp.ne.s32.totalorder %s68, %s71
    %p77 = scmp.eq.s32.totalorder %s11, 0
    %p78 = por %p76, %p77
    %p79 = scmp.ne.s32.totalorder %s68, %s71
    %p80 = scmp.eq.s32.totalorder %s16, 1
    %p81 = por %p79, %p80
    %p82 = scmp.ne.s32.totalorder %s71, %s72
    %p83 = scmp.eq.s32.totalorder %s16, 0
    %p84 = por %p82, %p83
    %p85 = scmp.ne.s32.totalorder %s71, %s72
    %p86 = scmp.eq.s32.totalorder %s17, 1
    %p87 = por %p85, %p86
    %p89 = scmp.ne.s32.totalorder %s72, %s88
    %p90 = scmp.eq.s32.totalorder %s17, 0
    %p91 = por %p89, %p90
    %s93 = sadd.s32 %s92, 1
    %p96 = scmp.eq.s32.totalorder %s11, 1
    %p97 = scmp.ne.s32.totalorder %s92, %s94
    %p98 = scmp.eq.s32.totalorder %s11, 0
    %p99 = por %p97, %p98
    %p100 = scmp.ne.s32.totalorder %s92, %s94
    %p101 = scmp.eq.s32.totalorder %s16, 1
    %p102 = por %p100, %p101
    %p103 = scmp.ne.s32.totalorder %s94, %s95
    %p104 = scmp.eq.s32.totalorder %s16, 0
    %p105 = por %p103, %p104
    %p106 = scmp.ne.s32.totalorder %s94, %s95
    %p107 = scmp.eq.s32.totalorder %s17, 1
    %p108 = por %p106, %p107
    %p110 = scmp.ne.s32.totalorder %s95, %s109
    %p111 = scmp.eq.s32.totalorder %s17, 0
    %p112 = por %p110, %p111
    %s114 = sadd.s32 %s113, 1
    %p117 = scmp.eq.s32.totalorder %s11, 1
    %p118 = scmp.ne.s32.totalorder %s113, %s115
    %p119 = scmp.eq.s32.totalorder %s11, 0
    %p120 = por %p118, %p119
    %p121 = scmp.ne.s32.totalorder %s113, %s115
    %p122 = scmp.eq.s32.totalorder %s16, 1
    %p123 = por %p121, %p122
    %p124 = scmp.ne.s32.totalorder %s115, %s116
    %p125 = scmp.eq.s32.totalorder %s16, 0
    %p126 = por %p124, %p125
    %p127 = scmp.ne.s32.totalorder %s115, %s116
    %p128 = scmp.eq.s32.totalorder %s17, 1
    %p129 = por %p127, %p128
    %p131 = scmp.ne.s32.totalorder %s116, %s130
    %p132 = scmp.eq.s32.totalorder %s17, 0
    %p133 = por %p131, %p132
    %p134 = scmp.le.s32.totalorder 1, %s11
    %p135 = scmp.lt.s32.totalorder %s11, 3
    %p136 = pnand %p134, %p135
    %p137 = pneg %p136
    // Predicated region
    $region9: #{residual_block_2d.3} parent=5 // pred_check
      _
    $region10: #{residual_block_2d.3} parent=5 // pred_check_branch
      %139 = sbr.rel (%p136) target = $region12
    $region11: #{residual_block_2d.3} parent=5 // pred_region
      %s140 = ssub.s32 %s11, 1
      // Predicated region
      $region13: #{residual_block_2d.3} parent=11 // pred_check
        %p141 = pneg %p58
      $region14: #{residual_block_2d.3} parent=11 // pred_check_branch
        %143 = sbr.rel (%p141) target = $region16
      $region15: #{residual_block_2d.3} parent=11 // pred_region
        _
      $region16: #{residual_block_2d.3} parent=11 // pred_fallthru
        _
    $region12: #{residual_block_2d.3} parent=5 // pred_fallthru
      _
    %p144 = scmp.lt.s32.totalorder %s11, 2
    // Predicated region
    $region17: #{residual_block_2d.3} parent=5 // pred_check
      %p145 = pneg %p144
    $region18: #{residual_block_2d.3} parent=5 // pred_check_branch
      %147 = sbr.rel (%p145) target = $region20
    $region19: #{residual_block_2d.3} parent=5 // pred_region
      // Predicated region
      $region21: #{residual_block_2d.3} parent=19 // pred_check
        %p148 = pneg %p31
      $region22: #{residual_block_2d.3} parent=19 // pred_check_branch
        %150 = sbr.rel (%p148) target = $region24
      $region23: #{residual_block_2d.3} parent=19 // pred_region
        %p151 = scmp.lt.s32.totalorder %s11, 1
        %s152 = scalar_select %p151, %s11, 1
        %s153 = smul.addr %s152, 2
        %s154 = smul.addr %s153, 8
        %s155 = scalar_lea.vmem %s0, %s154
      $region24: #{residual_block_2d.3} parent=19 // pred_fallthru
        _
    $region20: #{residual_block_2d.3} parent=5 // pred_fallthru
      _
    %p156 = scmp.le.s32.totalorder 1, %s11
    %p157 = scmp.lt.s32.totalorder %s11, 3
    %p158 = pnand %p156, %p157
    %p159 = pneg %p158
    // Predicated region
    $region25: #{residual_block_2d.3} parent=5 // pred_check
      _
    $region26: #{residual_block_2d.3} parent=5 // pred_check_branch
      %161 = sbr.rel (%p158) target = $region28
    $region27: #{residual_block_2d.3} parent=5 // pred_region
      %s162 = ssub.s32 %s11, 1
      %p163 = scmp.lt.s32.totalorder %s16, 1
      %s164 = scalar_select %p163, %s16, 1
      %s165 = smul.addr %s164, 2
      %s166 = smul.addr %s165, 8
      %s167 = scalar_lea.vmem %s0, %s166
      %p168 = pneg %p37
      %p169 = pneg %p34
      %p170 = pneg %p58
      %p171 = pneg %p55
      %p172 = pneg %p84
      %p173 = pneg %p81
      %p174 = scmp.lt.s32.totalorder %s16, 1
      %s175 = scalar_select %p174, %s16, 1
      %s176 = smul.addr %s175, 2
      %s177 = smul.addr %s176, 8
      %s178 = scalar_lea.vmem %s2, %s177
      %p179 = pneg %p105
      %p180 = pneg %p102
      %p181 = pneg %p126
      %p182 = pneg %p123
      %p183 = scmp.lt.s32.totalorder %s16, 1
      %s184 = scalar_select %p183, %s16, 1
      %s185 = smul.addr %s184, 2
      %s186 = smul.addr %s185, 8
      %s187 = scalar_lea.vmem %s0, %s186
      %p188 = scmp.lt.s32.totalorder %s16, 1
      %s189 = scalar_select %p188, %s16, 1
      %s190 = smul.addr %s189, 2
      %s191 = smul.addr %s190, 8
      %s192 = scalar_lea.vmem %s2, %s191
      %v193 = vld [vmem:[%s187] sm:$0xff]
      %v194 = vld [vmem:[%s187 + $0x8] sm:$0xff]
      %vm195 = vcmask 516096
      %196 = vst.msk [vmem:[#allocation2] sm:$0x1] %vm195, 0.0
      %197 = vst.msk [vmem:[#allocation2 + $0x11] sm:$0x1] %vm195, 0.0
      %vm198 = vcmask 523264
      %199 = vst.msk [vmem:[#allocation2 + $0x1] sm:$0xff] %vm198, %v193
      %200 = vst.msk [vmem:[#allocation2 + $0x9] sm:$0xff] %vm198, %v194
      %v201 = vld [vmem:[#allocation2] sm:$0xff]
      %v202 = vld [vmem:[#allocation2 + $0x8] sm:$0xff]
      %v203 = vld [vmem:[%s1] sm:$0xff]
      %v204 = vld [vmem:[%s1 + $0x8] sm:$0xff]
      %v205 = vld [vmem:[%s1 + $0x10] sm:$0xff]
      %v206 = vld [vmem:[%s1 + $0x18] sm:$0xff]
      %v207 = vld [vmem:[%s1 + $0x20] sm:$0xff]
      %v208 = vld [vmem:[%s1 + $0x28] sm:$0xff]
      %v209 = vld [vmem:[%s1 + $0x30] sm:$0xff]
      %v210 = vld [vmem:[%s1 + $0x38] sm:$0xff]
      %v211 = vld [vmem:[#allocation2 + $0x1] sm:$0xff]
      %v212 = vld [vmem:[#allocation2 + $0x9] sm:$0xff]
      %s213 = scalar_lea.vmem %s1, 64
      %v214 = vld [vmem:[%s213] sm:$0xff]
      %v215 = vld [vmem:[%s213 + $0x8] sm:$0xff]
      %v216 = vld [vmem:[%s213 + $0x10] sm:$0xff]
      %v217 = vld [vmem:[%s213 + $0x18] sm:$0xff]
      %v218 = vld [vmem:[%s213 + $0x20] sm:$0xff]
      %v219 = vld [vmem:[%s213 + $0x28] sm:$0xff]
      %v220 = vld [vmem:[%s213 + $0x30] sm:$0xff]
      %v221 = vld [vmem:[%s213 + $0x38] sm:$0xff]
      %v223 = vsel %vm198, %v211, 0
      %v226 = vsel %vm198, %v212, 0
      %228 = vmatpush.msra.mxu0 0.0
      %229 = vmatpush.msra.mxu0 0.0
      %230 = vmatpush.msra.mxu0 0.0
      %231 = vmatpush.msra.mxu0 0.0
      %232 = vmatpush.msra.mxu0 0.0
      %233 = vmatpush.msra.mxu0 0.0
      %234 = vmatpush.msra.mxu0 0.0
      %235 = vmatpush.msra.mxu0 0.0
      %236 = vmatpush.msra.mxu0 %v221
      %237 = vmatpush.msra.mxu0 %v220
      %238 = vmatpush.msra.mxu0 %v219
      %239 = vmatpush.msra.mxu0 %v218
      %240 = vmatpush.msra.mxu0 %v217
      %241 = vmatpush.msra.mxu0 %v216
      %242 = vmatpush.msra.mxu0 %v215
      %243 = vmatpush.msra.mxu0 %v214
      %244 = vmatmul.f32.gmra.mxu0 %v223
      %v245 = vpop.f32.mrf.mxu0
      %v246 = vadd.f32 0.0, %v245
      %247 = vmatmul.f32.gmra.mxu0 %v226
      %v248 = vpop.f32.mrf.mxu0
      %v249 = vadd.f32 0.0, %v248
      %250 = vdwg.mxu0
      %v252 = vsel %vm198, %v201, 0
      %v255 = vsel %vm198, %v202, 0
      %257 = vmatpush.msra.mxu0 0.0
      %258 = vmatpush.msra.mxu0 0.0
      %259 = vmatpush.msra.mxu0 0.0
      %260 = vmatpush.msra.mxu0 0.0
      %261 = vmatpush.msra.mxu0 0.0
      %262 = vmatpush.msra.mxu0 0.0
      %263 = vmatpush.msra.mxu0 0.0
      %264 = vmatpush.msra.mxu0 0.0
      %265 = vmatpush.msra.mxu0 %v210
      %266 = vmatpush.msra.mxu0 %v209
      %267 = vmatpush.msra.mxu0 %v208
      %268 = vmatpush.msra.mxu0 %v207
      %269 = vmatpush.msra.mxu0 %v206
      %270 = vmatpush.msra.mxu0 %v205
      %271 = vmatpush.msra.mxu0 %v204
      %272 = vmatpush.msra.mxu0 %v203
      %273 = vmatmul.f32.gmra.mxu0 %v252
      %v274 = vpop.f32.mrf.mxu0
      %v275 = vadd.f32 %v246, %v274
      %276 = vmatmul.f32.gmra.mxu0 %v255
      %v277 = vpop.f32.mrf.mxu0
      %v278 = vadd.f32 %v249, %v277
      %279 = vdwg.mxu0
      %v280 = vld [vmem:[#allocation2 + $0x2] sm:$0xff]
      %v281 = vld [vmem:[#allocation2 + $0xa] sm:$0xff]
      %s282 = scalar_lea.vmem %s1, 128
      %v283 = vld [vmem:[%s282] sm:$0xff]
      %v284 = vld [vmem:[%s282 + $0x8] sm:$0xff]
      %v285 = vld [vmem:[%s282 + $0x10] sm:$0xff]
      %v286 = vld [vmem:[%s282 + $0x18] sm:$0xff]
      %v287 = vld [vmem:[%s282 + $0x20] sm:$0xff]
      %v288 = vld [vmem:[%s282 + $0x28] sm:$0xff]
      %v289 = vld [vmem:[%s282 + $0x30] sm:$0xff]
      %v290 = vld [vmem:[%s282 + $0x38] sm:$0xff]
      %v292 = vsel %vm198, %v280, 0
      %v295 = vsel %vm198, %v281, 0
      %297 = vmatpush.msra.mxu0 0.0
      %298 = vmatpush.msra.mxu0 0.0
      %299 = vmatpush.msra.mxu0 0.0
      %300 = vmatpush.msra.mxu0 0.0
      %301 = vmatpush.msra.mxu0 0.0
      %302 = vmatpush.msra.mxu0 0.0
      %303 = vmatpush.msra.mxu0 0.0
      %304 = vmatpush.msra.mxu0 0.0
      %305 = vmatpush.msra.mxu0 %v290
      %306 = vmatpush.msra.mxu0 %v289
      %307 = vmatpush.msra.mxu0 %v288
      %308 = vmatpush.msra.mxu0 %v287
      %309 = vmatpush.msra.mxu0 %v286
      %310 = vmatpush.msra.mxu0 %v285
      %311 = vmatpush.msra.mxu0 %v284
      %312 = vmatpush.msra.mxu0 %v283
      %313 = vmatmul.f32.gmra.mxu0 %v292
      %v314 = vpop.f32.mrf.mxu0
      %v315 = vadd.f32 0.0, %v314
      %316 = vmatmul.f32.gmra.mxu0 %v295
      %v317 = vpop.f32.mrf.mxu0
      %v318 = vadd.f32 0.0, %v317
      %319 = vdwg.mxu0
      %v320 = vadd.f32 %v275, %v315
      %v321 = vadd.f32 %v278, %v318
      %322 = vst [vmem:[%s192] sm:$0xff] %v320
      %323 = vst [vmem:[%s192 + $0x8] sm:$0xff] %v321
      %vm324 = vcmask 130048
      %v326 = vsel %vm324, 1.0, 0
      %328 = vmatpush.msra.mxu0 0.0
      %329 = vmatpush.msra.mxu0 0.0
      %330 = vmatpush.msra.mxu0 0.0
      %331 = vmatpush.msra.mxu0 0.0
      %332 = vmatpush.msra.mxu0 0.0
      %333 = vmatpush.msra.mxu0 0.0
      %334 = vmatpush.msra.mxu0 0.0
      %335 = vmatpush.msra.mxu0 0.0
      %336 = vmatpush.msra.mxu0 0.0
      %337 = vmatpush.msra.mxu0 0.0
      %338 = vmatpush.msra.mxu0 0.0
      %339 = vmatpush.msra.mxu0 0.0
      %340 = vmatpush.msra.mxu0 0.0
      %341 = vmatpush.msra.mxu0 0.0
      %342 = vmatpush.msra.mxu0 %v321
      %343 = vmatpush.msra.mxu0 %v320
      %344 = vmatmul.f32.gmra.mxu0 %v326
      %v345 = vpop.f32.mrf.mxu0
      %v346 = vadd.f32 0.0, %v345
      %347 = vdwg.mxu0
      %v348 = vmul.f32 %v320, %v320
      %v349 = vmul.f32 %v321, %v321
      %350 = vmatpush.msra.mxu0 0.0
      %351 = vmatpush.msra.mxu0 0.0
      %352 = vmatpush.msra.mxu0 0.0
      %353 = vmatpush.msra.mxu0 0.0
      %354 = vmatpush.msra.mxu0 0.0
      %355 = vmatpush.msra.mxu0 0.0
      %356 = vmatpush.msra.mxu0 0.0
      %357 = vmatpush.msra.mxu0 0.0
      %358 = vmatpush.msra.mxu0 0.0
      %359 = vmatpush.msra.mxu0 0.0
      %360 = vmatpush.msra.mxu0 0.0
      %361 = vmatpush.msra.mxu0 0.0
      %362 = vmatpush.msra.mxu0 0.0
      %363 = vmatpush.msra.mxu0 0.0
      %364 = vmatpush.msra.mxu0 %v349
      %365 = vmatpush.msra.mxu0 %v348
      %366 = vmatmul.f32.gmra.mxu0 %v326
      %v367 = vpop.f32.mrf.mxu0
      %v368 = vadd.f32 0.0, %v367
      %369 = vdwg.mxu0
      %p370 = scmp.eq.s32.totalorder %s16, 0
      // Predicated region
      $region29: #{residual_block_2d.3} parent=27 // pred_check
        %p371 = pneg %p370
      $region30: #{residual_block_2d.3} parent=27 // pred_check_branch
        %373 = sbr.rel (%p371) target = $region32
      $region31: #{residual_block_2d.3} parent=27 // pred_region
        %374 = vst [vmem:[%s3] sm:$0x1] 0.0
        %375 = vst [vmem:[%s4] sm:$0x1] 0.0
      $region32: #{residual_block_2d.3} parent=27 // pred_fallthru
        _
      %v376 = vld [vmem:[%s3] sm:$0x1]
      %v377 = vadd.f32 %v376, %v346
      %378 = vst [vmem:[%s3] sm:$0x1] %v377
      %v379 = vld [vmem:[%s4] sm:$0x1]
      %v380 = vadd.f32 %v379, %v368
      %381 = vst [vmem:[%s4] sm:$0x1] %v380
      %p382 = scmp.lt.s32.totalorder %s16, 1
      %s383 = scalar_select %p382, %s16, 1
      %s384 = smul.addr %s383, 2
      %s385 = smul.addr %s384, 8
      %s386 = scalar_lea.vmem %s2, %s385
      // Predicated region
      $region33: #{residual_block_2d.3} parent=27 // pred_check
        %p387 = pneg %p81
      $region34: #{residual_block_2d.3} parent=27 // pred_check_branch
        %389 = sbr.rel (%p387) target = $region36
      $region35: #{residual_block_2d.3} parent=27 // pred_region
        _
      $region36: #{residual_block_2d.3} parent=27 // pred_fallthru
        _
      // Predicated region
      $region37: #{residual_block_2d.3} parent=27 // pred_check
        %p390 = pneg %p102
      $region38: #{residual_block_2d.3} parent=27 // pred_check_branch
        %392 = sbr.rel (%p390) target = $region40
      $region39: #{residual_block_2d.3} parent=27 // pred_region
        _
      $region40: #{residual_block_2d.3} parent=27 // pred_fallthru
        _
      // Predicated region
      $region41: #{residual_block_2d.3} parent=27 // pred_check
        %p393 = pneg %p123
      $region42: #{residual_block_2d.3} parent=27 // pred_check_branch
        %395 = sbr.rel (%p393) target = $region44
      $region43: #{residual_block_2d.3} parent=27 // pred_region
        _
      $region44: #{residual_block_2d.3} parent=27 // pred_fallthru
        _
      // Predicated region
      $region45: #{residual_block_2d.3} parent=27 // pred_check
        %p396 = pneg %p102
      $region46: #{residual_block_2d.3} parent=27 // pred_check_branch
        %398 = sbr.rel (%p396) target = $region48
      $region47: #{residual_block_2d.3} parent=27 // pred_region
        _
      $region48: #{residual_block_2d.3} parent=27 // pred_fallthru
        _
      // Predicated region
      $region49: #{residual_block_2d.3} parent=27 // pred_check
        %p399 = pneg %p123
      $region50: #{residual_block_2d.3} parent=27 // pred_check_branch
        %401 = sbr.rel (%p399) target = $region52
      $region51: #{residual_block_2d.3} parent=27 // pred_region
        _
      $region52: #{residual_block_2d.3} parent=27 // pred_fallthru
        _
    $region28: #{residual_block_2d.3} parent=5 // pred_fallthru
      _
    %p402 = scmp.le.s32.totalorder 2, %s11
    // Predicated region
    $region53: #{residual_block_2d.3} parent=5 // pred_check
      %p403 = pneg %p402
    $region54: #{residual_block_2d.3} parent=5 // pred_check_branch
      %405 = sbr.rel (%p403) target = $region56
    $region55: #{residual_block_2d.3} parent=5 // pred_region
      %s406 = ssub.s32 %s11, 2
      // Predicated region
      $region57: #{residual_block_2d.3} parent=55 // pred_check
        %p407 = pneg %p87
      $region58: #{residual_block_2d.3} parent=55 // pred_check_branch
        %409 = sbr.rel (%p407) target = $region60
      $region59: #{residual_block_2d.3} parent=55 // pred_region
        %p410 = scmp.lt.s32.totalorder %s17, 1
        %s411 = scalar_select %p410, %s17, 1
        %s412 = smul.addr %s411, 2
        %s413 = smul.addr %s412, 8
        %s414 = scalar_lea.vmem %s2, %s413
      $region60: #{residual_block_2d.3} parent=55 // pred_fallthru
        _
    $region56: #{residual_block_2d.3} parent=5 // pred_fallthru
      _
  $region6: #{residual_block_2d.3} parent=0 // loop_footer
    %s15 = sadd.s32 1, %s11
  $region7: #{residual_block_2d.3} parent=0 // loop_footer_branch
    %10 = sbr.rel target = $region3
  $region8: #{residual_block_2d.3} parent=0 // loop_exit
    _

// kernel: tile.28
$region0: #{tile.28}
  #allocation0 [shape = 's32[1]{0}', space=sflag, size = 0x4, scoped, tag = 'scoped memory for tile.28']
  %s0 = inlined_call_operand.vmem [shape: f32[8], index: 0, kind: input, shape index: {}]
  %s1 = inlined_call_operand.vmem [shape: f32[16,8], index: 1, kind: output, shape index: {}]
  // Predicated region
  $region2: #{tile.28} parent=0 // pred_check
    _
  $region3: #{tile.28} parent=0 // pred_check_branch
    %3 = sbr.rel (0) target = $region5
  $region4: #{tile.28} parent=0 // pred_region
    _
  $region5: #{tile.28} parent=0 // pred_fallthru
    _
  %v4 = vld [vmem:[%s0] ss:$0 sm:$0xff]
  %5 = vst [vmem:[%s1] sm:$0xff] %v4
  %s6 = scalar_lea.vmem %s1, 8
  %7 = vst [vmem:[%s6] sm:$0xff] %v4

// kernel: tile.29
$region0: #{tile.29}
  %s0 = inlined_call_operand.vmem [shape: f32[16,8], index: 0, kind: input, shape index: {}]
  %s1 = inlined_call_operand.vmem [shape: f32[1,128], index: 1, kind: output, shape index: {}]
  $region1: #{tile.29} parent=0
    #allocation0 [shape = 'u8[4096]{0}', space=vmem, size = 0x1000, scoped, tag = 'scoped mem for output reshape']
    %v2 = vld [vmem:[%s0] sm:$0x1]
    %vm3 = vcmask 64512
    %4 = vst.msk [vmem:[#allocation0] sm:$0x1] %vm3, %v2
    %s5 = scalar_lea.vmem %s0, 15
    %v6 = vld [vmem:[%s5] sm:$0x1]
    %7 = vrot.lane.b32.xlu0 %v6, 120
    %v8 = vpop.permute.xlu0 %7
    %vm9 = vcmask 1048512
    %10 = vst.msk [vmem:[#allocation0] sm:$0x1] %vm9, %v8
    %s11 = scalar_lea.vmem %s0, 14
    %v12 = vld [vmem:[%s11] sm:$0x1]
    %13 = vrot.lane.b32.xlu0 %v12, 112
    %v14 = vpop.permute.xlu0 %13
    %vm15 = vcmask 982912
    %16 = vst.msk [vmem:[#allocation0] sm:$0x1] %vm15, %v14
    %s17 = scalar_lea.vmem %s0, 13
    %v18 = vld [vmem:[%s17] sm:$0x1]
    %19 = vrot.lane.b32.xlu0 %v18, 104
    %v20 = vpop.permute.xlu0 %19
    %vm21 = vcmask 917312
    %22 = vst.msk [vmem:[#allocation0] sm:$0x1] %vm21, %v20
    %s23 = scalar_lea.vmem %s0, 12
    %v24 = vld [vmem:[%s23] sm:$0x1]
    %25 = vrot.lane.b32.xlu0 %v24, 96
    %v26 = vpop.permute.xlu0 %25
    %vm27 = vcmask 851712
    %28 = vst.msk [vmem:[#allocation0] sm:$0x1] %vm27, %v26
    %s29 = scalar_lea.vmem %s0, 11
    %v30 = vld [vmem:[%s29] sm:$0x1]
    %31 = vrot.lane.b32.xlu0 %v30, 88
    %v32 = vpop.permute.xlu0 %31
    %vm33 = vcmask 786112
    %34 = vst.msk [vmem:[#allocation0] sm:$0x1] %vm33, %v32
    %s35 = scalar_lea.vmem %s0, 10
    %v36 = vld [vmem:[%s35] sm:$0x1]
    %37 = vrot.lane.b32.xlu0 %v36, 80
    %v38 = vpop.permute.xlu0 %37
    %vm39 = vcmask 720512
    %40 = vst.msk [vmem:[#allocation0] sm:$0x1] %vm39, %v38
    %s41 = scalar_lea.vmem %s0, 9
    %v42 = vld [vmem:[%s41] sm:$0x1]
    %43 = vrot.lane.b32.xlu0 %v42, 72
    %v44 = vpop.permute.xlu0 %43
    %vm45 = vcmask 654912
    %46 = vst.msk [vmem:[#allocation0] sm:$0x1] %vm45, %v44
    %s47 = scalar_lea.vmem %s0, 8
    %v48 = vld [vmem:[%s47] sm:$0x1]
    %49 = vrot.lane.b32.xlu0 %v48, 64
    %v50 = vpop.permute.xlu0 %49
    %vm51 = vcmask 589312
    %52 = vst.msk [vmem:[#allocation0] sm:$0x1] %vm51, %v50
    %s53 = scalar_lea.vmem %s0, 7
    %v54 = vld [vmem:[%s53] sm:$0x1]
    %55 = vrot.lane.b32.xlu0 %v54, 56
    %v56 = vpop.permute.xlu0 %55
    %vm57 = vcmask 523712
    %58 = vst.msk [vmem:[#allocation0] sm:$0x1] %vm57, %v56
    %s59 = scalar_lea.vmem %s0, 6
    %v60 = vld [vmem:[%s59] sm:$0x1]
    %61 = vrot.lane.b32.xlu0 %v60, 48
    %v62 = vpop.permute.xlu0 %61
    %vm63 = vcmask 458112
    %64 = vst.msk [vmem:[#allocation0] sm:$0x1] %vm63, %v62
    %s65 = scalar_lea.vmem %s0, 5
    %v66 = vld [vmem:[%s65] sm:$0x1]
    %67 = vrot.lane.b32.xlu0 %v66, 40
    %v68 = vpop.permute.xlu0 %67
    %vm69 = vcmask 392512
    %70 = vst.msk [vmem:[#allocation0] sm:$0x1] %vm69, %v68
    %s71 = scalar_lea.vmem %s0, 4
    %v72 = vld [vmem:[%s71] sm:$0x1]
    %73 = vrot.lane.b32.xlu0 %v72, 32
    %v74 = vpop.permute.xlu0 %73
    %vm75 = vcmask 326912
    %76 = vst.msk [vmem:[#allocation0] sm:$0x1] %vm75, %v74
    %s77 = scalar_lea.vmem %s0, 3
    %v78 = vld [vmem:[%s77] sm:$0x1]
    %79 = vrot.lane.b32.xlu0 %v78, 24
    %v80 = vpop.permute.xlu0 %79
    %vm81 = vcmask 261312
    %82 = vst.msk [vmem:[#allocation0] sm:$0x1] %vm81, %v80
    %s83 = scalar_lea.vmem %s0, 2
    %v84 = vld [vmem:[%s83] sm:$0x1]
    %85 = vrot.lane.b32.xlu0 %v84, 16
    %v86 = vpop.permute.xlu0 %85
    %vm87 = vcmask 195712
    %88 = vst.msk [vmem:[#allocation0] sm:$0x1] %vm87, %v86
    %s89 = scalar_lea.vmem %s0, 1
    %v90 = vld [vmem:[%s89] sm:$0x1]
    %91 = vrot.lane.b32.xlu0 %v90, 8
    %v92 = vpop.permute.xlu0 %91
    %vm93 = vcmask 130112
    %94 = vst.msk [vmem:[#allocation0] sm:$0x1] %vm93, %v92
    %s96 = ssub.s32 2, 1
    %v97 = vld [vmem:[#allocation0] sm:%s96]
    %s99 = ssub.s32 2, 1
    %100 = vst [vmem:[%s1] sm:%s99] %v97

// kernel: residual_block_2d.4
$region0: #{residual_block_2d.4}
  #allocation0 [shape = 'u32[]', space=smem, size = 0x4, offset = 0x4, fixed_abs, tag = 'smem constant byte address 0x4 - core index']
  #allocation1 [shape = 'u32[72,128]{1,0:T(1,128)}', space=vmem, size = 0x9000, scoped, tag = 'internal scratch']
  #allocation2 [shape = 'f32[18,128]{1,0:T(8,128)}', space=vmem, size = 0x3000, scoped, tag = 'scratch operand']
  %s0 = inlined_call_operand.vmem [shape: f32[2,16,128], index: 0, kind: input, shape index: {}]
  %s1 = inlined_call_operand.vmem [shape: f32[1,128], index: 1, kind: input, shape index: {}]
  %s2 = inlined_call_operand.vmem [shape: f32[1,128], index: 2, kind: input, shape index: {}]
  %s3 = inlined_call_operand.vmem [shape: f32[3,128,128], index: 3, kind: input, shape index: {}]
  %s4 = inlined_call_operand.vmem [shape: f32[2,16,128], index: 4, kind: output, shape index: {0}]
  %s5 = inlined_call_operand.vmem [shape: f32[1,128], index: 5, kind: output, shape index: {1}]
  %s6 = inlined_call_operand.vmem [shape: f32[1,128], index: 6, kind: output, shape index: {2}]
  %7 = xla_tuple %s4, %s5, %s6
  %s8 = sld [smem:[#allocation0]]
  $region69: #{residual_block_2d.4} parent=0
    _
  %s10 = ssub.s32 1, %s8
  %s11 = scalar_select 0, %s10, %s8
  loop: start=0, step=1, limit=4
  $region2: #{residual_block_2d.4} parent=0 // loop_pre_header
    _
  $region3: #{residual_block_2d.4} parent=0 // loop_header
    %s13 = sphi 0, %s17
    %p14 = scmp.ge.s32.totalorder %s13, 4
    %s23 = sphi 0, %s25
    %s26 = sphi 0, %s23
    %s27 = sphi 0, %s26
    %s43 = sphi 0, %s27
    %s47 = sphi 0, %s47
    %s49 = sphi 0, %s47
    %s50 = sphi 0, %s49
    %s64 = sphi 0, %s50
    %s68 = sphi 0, %s68
    %s70 = sphi 0, %s68
    %s71 = sphi 0, %s70
    %s85 = sphi 0, %s71
    %s89 = sphi 0, %s89
    %s91 = sphi 0, %s89
    %s92 = sphi 0, %s91
    %s106 = sphi 0, %s92
    %s112 = sphi 0, %s114
    %s115 = sphi 0, %s112
    %s116 = sphi 0, %s115
    %s132 = sphi 0, %s116
    %s136 = sphi 0, %s136
    %s138 = sphi 0, %s136
    %s139 = sphi 0, %s138
    %s153 = sphi 0, %s139
    %s157 = sphi 0, %s157
    %s159 = sphi 0, %s157
    %s160 = sphi 0, %s159
    %s174 = sphi 0, %s160
  $region4: #{residual_block_2d.4} parent=0 // loop_header_branch
    %16 = sbr.rel (%p14) target = $region8
  $region5: #{residual_block_2d.4} parent=0 // loop_body
    %s18 = ssub.s32 %s13, 1
    %s19 = ssub.s32 %s13, 2
    %s20 = sadd.s32 %s13, 1
    %s21 = ssub.s32 %s13, %s20
    %p22 = scmp.eq.s32.totalorder %s21, 0
    %s24 = sadd.s32 %s23, 1
    %s25 = scalar_select %p22, %s23, %s24
    %p28 = pneg %p22
    %p29 = scmp.eq.s32.totalorder %s13, 1
    %p30 = por %p28, %p29
    %p31 = scmp.ne.s32.totalorder %s23, %s26
    %p32 = scmp.eq.s32.totalorder %s13, 0
    %p33 = por %p31, %p32
    %p34 = scmp.ne.s32.totalorder %s23, %s26
    %p35 = scmp.eq.s32.totalorder %s18, 1
    %p36 = por %p34, %p35
    %p37 = scmp.ne.s32.totalorder %s26, %s27
    %p38 = scmp.eq.s32.totalorder %s18, 0
    %p39 = por %p37, %p38
    %p40 = scmp.ne.s32.totalorder %s26, %s27
    %p41 = scmp.eq.s32.totalorder %s19, 1
    %p42 = por %p40, %p41
    %p44 = scmp.ne.s32.totalorder %s27, %s43
    %p45 = scmp.eq.s32.totalorder %s19, 0
    %p46 = por %p44, %p45
    %s48 = sadd.s32 %s47, 1
    %p51 = scmp.eq.s32.totalorder %s13, 1
    %p52 = scmp.ne.s32.totalorder %s47, %s49
    %p53 = scmp.eq.s32.totalorder %s13, 0
    %p54 = por %p52, %p53
    %p55 = scmp.ne.s32.totalorder %s47, %s49
    %p56 = scmp.eq.s32.totalorder %s18, 1
    %p57 = por %p55, %p56
    %p58 = scmp.ne.s32.totalorder %s49, %s50
    %p59 = scmp.eq.s32.totalorder %s18, 0
    %p60 = por %p58, %p59
    %p61 = scmp.ne.s32.totalorder %s49, %s50
    %p62 = scmp.eq.s32.totalorder %s19, 1
    %p63 = por %p61, %p62
    %p65 = scmp.ne.s32.totalorder %s50, %s64
    %p66 = scmp.eq.s32.totalorder %s19, 0
    %p67 = por %p65, %p66
    %s69 = sadd.s32 %s68, 1
    %p72 = scmp.eq.s32.totalorder %s13, 1
    %p73 = scmp.ne.s32.totalorder %s68, %s70
    %p74 = scmp.eq.s32.totalorder %s13, 0
    %p75 = por %p73, %p74
    %p76 = scmp.ne.s32.totalorder %s68, %s70
    %p77 = scmp.eq.s32.totalorder %s18, 1
    %p78 = por %p76, %p77
    %p79 = scmp.ne.s32.totalorder %s70, %s71
    %p80 = scmp.eq.s32.totalorder %s18, 0
    %p81 = por %p79, %p80
    %p82 = scmp.ne.s32.totalorder %s70, %s71
    %p83 = scmp.eq.s32.totalorder %s19, 1
    %p84 = por %p82, %p83
    %p86 = scmp.ne.s32.totalorder %s71, %s85
    %p87 = scmp.eq.s32.totalorder %s19, 0
    %p88 = por %p86, %p87
    %s90 = sadd.s32 %s89, 1
    %p93 = scmp.eq.s32.totalorder %s13, 1
    %p94 = scmp.ne.s32.totalorder %s89, %s91
    %p95 = scmp.eq.s32.totalorder %s13, 0
    %p96 = por %p94, %p95
    %p97 = scmp.ne.s32.totalorder %s89, %s91
    %p98 = scmp.eq.s32.totalorder %s18, 1
    %p99 = por %p97, %p98
    %p100 = scmp.ne.s32.totalorder %s91, %s92
    %p101 = scmp.eq.s32.totalorder %s18, 0
    %p102 = por %p100, %p101
    %p103 = scmp.ne.s32.totalorder %s91, %s92
    %p104 = scmp.eq.s32.totalorder %s19, 1
    %p105 = por %p103, %p104
    %p107 = scmp.ne.s32.totalorder %s92, %s106
    %p108 = scmp.eq.s32.totalorder %s19, 0
    %p109 = por %p107, %p108
    %s110 = ssub.s32 %s13, %s20
    %p111 = scmp.eq.s32.totalorder %s110, 0
    %s113 = sadd.s32 %s112, 1
    %s114 = scalar_select %p111, %s112, %s113
    %p117 = pneg %p111
    %p118 = scmp.eq.s32.totalorder %s13, 1
    %p119 = por %p117, %p118
    %p120 = scmp.ne.s32.totalorder %s112, %s115
    %p121 = scmp.eq.s32.totalorder %s13, 0
    %p122 = por %p120, %p121
    %p123 = scmp.ne.s32.totalorder %s112, %s115
    %p124 = scmp.eq.s32.totalorder %s18, 1
    %p125 = por %p123, %p124
    %p126 = scmp.ne.s32.totalorder %s115, %s116
    %p127 = scmp.eq.s32.totalorder %s18, 0
    %p128 = por %p126, %p127
    %p129 = scmp.ne.s32.totalorder %s115, %s116
    %p130 = scmp.eq.s32.totalorder %s19, 1
    %p131 = por %p129, %p130
    %p133 = scmp.ne.s32.totalorder %s116, %s132
    %p134 = scmp.eq.s32.totalorder %s19, 0
    %p135 = por %p133, %p134
    %s137 = sadd.s32 %s136, 1
    %p140 = scmp.eq.s32.totalorder %s13, 1
    %p141 = scmp.ne.s32.totalorder %s136, %s138
    %p142 = scmp.eq.s32.totalorder %s13, 0
    %p143 = por %p141, %p142
    %p144 = scmp.ne.s32.totalorder %s136, %s138
    %p145 = scmp.eq.s32.totalorder %s18, 1
    %p146 = por %p144, %p145
    %p147 = scmp.ne.s32.totalorder %s138, %s139
    %p148 = scmp.eq.s32.totalorder %s18, 0
    %p149 = por %p147, %p148
    %p150 = scmp.ne.s32.totalorder %s138, %s139
    %p151 = scmp.eq.s32.totalorder %s19, 1
    %p152 = por %p150, %p151
    %p154 = scmp.ne.s32.totalorder %s139, %s153
    %p155 = scmp.eq.s32.totalorder %s19, 0
    %p156 = por %p154, %p155
    %s158 = sadd.s32 %s157, 1
    %p161 = scmp.eq.s32.totalorder %s13, 1
    %p162 = scmp.ne.s32.totalorder %s157, %s159
    %p163 = scmp.eq.s32.totalorder %s13, 0
    %p164 = por %p162, %p163
    %p165 = scmp.ne.s32.totalorder %s157, %s159
    %p166 = scmp.eq.s32.totalorder %s18, 1
    %p167 = por %p165, %p166
    %p168 = scmp.ne.s32.totalorder %s159, %s160
    %p169 = scmp.eq.s32.totalorder %s18, 0
    %p170 = por %p168, %p169
    %p171 = scmp.ne.s32.totalorder %s159, %s160
    %p172 = scmp.eq.s32.totalorder %s19, 1
    %p173 = por %p171, %p172
    %p175 = scmp.ne.s32.totalorder %s160, %s174
    %p176 = scmp.eq.s32.totalorder %s19, 0
    %p177 = por %p175, %p176
    %p178 = scmp.le.s32.totalorder 1, %s13
    %p179 = scmp.lt.s32.totalorder %s13, 3
    %p180 = pnand %p178, %p179
    %p181 = pneg %p180
    // Predicated region
    $region9: #{residual_block_2d.4} parent=5 // pred_check
      _
    $region10: #{residual_block_2d.4} parent=5 // pred_check_branch
      %183 = sbr.rel (%p180) target = $region12
    $region11: #{residual_block_2d.4} parent=5 // pred_region
      %s184 = ssub.s32 %s13, 1
      // Predicated region
      $region13: #{residual_block_2d.4} parent=11 // pred_check
        %p185 = pneg %p60
      $region14: #{residual_block_2d.4} parent=11 // pred_check_branch
        %187 = sbr.rel (%p185) target = $region16
      $region15: #{residual_block_2d.4} parent=11 // pred_region
        _
      $region16: #{residual_block_2d.4} parent=11 // pred_fallthru
        _
      // Predicated region
      $region17: #{residual_block_2d.4} parent=11 // pred_check
        %p188 = pneg %p81
      $region18: #{residual_block_2d.4} parent=11 // pred_check_branch
        %190 = sbr.rel (%p188) target = $region20
      $region19: #{residual_block_2d.4} parent=11 // pred_region
        _
      $region20: #{residual_block_2d.4} parent=11 // pred_fallthru
        _
      // Predicated region
      $region21: #{residual_block_2d.4} parent=11 // pred_check
        %p191 = pneg %p102
      $region22: #{residual_block_2d.4} parent=11 // pred_check_branch
        %193 = sbr.rel (%p191) target = $region24
      $region23: #{residual_block_2d.4} parent=11 // pred_region
        _
      $region24: #{residual_block_2d.4} parent=11 // pred_fallthru
        _
    $region12: #{residual_block_2d.4} parent=5 // pred_fallthru
      _
    %p194 = scmp.lt.s32.totalorder %s13, 2
    // Predicated region
    $region25: #{residual_block_2d.4} parent=5 // pred_check
      %p195 = pneg %p194
    $region26: #{residual_block_2d.4} parent=5 // pred_check_branch
      %197 = sbr.rel (%p195) target = $region28
    $region27: #{residual_block_2d.4} parent=5 // pred_region
      // Predicated region
      $region29: #{residual_block_2d.4} parent=27 // pred_check
        %p198 = pneg %p33
      $region30: #{residual_block_2d.4} parent=27 // pred_check_branch
        %200 = sbr.rel (%p198) target = $region32
      $region31: #{residual_block_2d.4} parent=27 // pred_region
        %p201 = scmp.lt.s32.totalorder %s13, 1
        %s202 = scalar_select %p201, %s13, 1
        %s203 = smul.addr %s202, 2
        %s204 = smul.addr %s203, 8
        %s205 = scalar_lea.vmem %s0, %s204
      $region32: #{residual_block_2d.4} parent=27 // pred_fallthru
        _
    $region28: #{residual_block_2d.4} parent=5 // pred_fallthru
      _
    %p206 = scmp.le.s32.totalorder 1, %s13
    %p207 = scmp.lt.s32.totalorder %s13, 3
    %p208 = pnand %p206, %p207
    %p209 = pneg %p208
    // Predicated region
    $region33: #{residual_block_2d.4} parent=5 // pred_check
      _
    $region34: #{residual_block_2d.4} parent=5 // pred_check_branch
      %211 = sbr.rel (%p208) target = $region36
    $region35: #{residual_block_2d.4} parent=5 // pred_region
      %s212 = ssub.s32 %s13, 1
      %p213 = scmp.lt.s32.totalorder %s18, 1
      %s214 = scalar_select %p213, %s18, 1
      %s215 = smul.addr %s214, 2
      %s216 = smul.addr %s215, 8
      %s217 = scalar_lea.vmem %s0, %s216
      %p218 = pneg %p39
      %p219 = pneg %p36
      %p220 = pneg %p60
      %p221 = pneg %p57
      %p222 = pneg %p81
      %p223 = pneg %p78
      %p224 = pneg %p102
      %p225 = pneg %p99
      %p226 = pneg %p128
      %p227 = pneg %p125
      %p228 = scmp.lt.s32.totalorder %s18, 1
      %s229 = scalar_select %p228, %s18, 1
      %s230 = smul.addr %s229, 2
      %s231 = smul.addr %s230, 8
      %s232 = scalar_lea.vmem %s4, %s231
      %p233 = pneg %p149
      %p234 = pneg %p146
      %p235 = pneg %p170
      %p236 = pneg %p167
      %p237 = scmp.lt.s32.totalorder %s18, 1
      %s238 = scalar_select %p237, %s18, 1
      %s239 = smul.addr %s238, 2
      %s240 = smul.addr %s239, 8
      %s241 = scalar_lea.vmem %s0, %s240
      %p242 = scmp.lt.s32.totalorder %s18, 1
      %s243 = scalar_select %p242, %s18, 1
      %s244 = smul.addr %s243, 2
      %s245 = smul.addr %s244, 8
      %s246 = scalar_lea.vmem %s4, %s245
      %v247 = vld [vmem:[%s241] sm:$0xff]
      %v248 = vld [vmem:[%s241 + $0x8] sm:$0xff]
      %v249 = vld [vmem:[%s1] sm:$0x1]
      %v251 = vperm.slane %v249, 0
      %v253 = vmul.f32 %v247, %v251
      %v254 = vmul.f32 %v248, %v251
      %v255 = vld [vmem:[%s2] sm:$0x1]
      %v257 = vperm.slane %v255, 0
      %v259 = vadd.f32 %v253, %v257
      %v260 = vadd.f32 %v254, %v257
      %v261 = vmax.f32 %v259, 0.0
      %v262 = vmax.f32 %v260, 0.0
      %263 = vst [vmem:[#allocation2] sm:$0x1] 0.0
      %264 = vst [vmem:[#allocation2 + $0x11] sm:$0x1] 0.0
      %265 = vst [vmem:[#allocation2 + $0x1] sm:$0xff] %v261
      %266 = vst [vmem:[#allocation2 + $0x9] sm:$0xff] %v262
      %v267 = vld [vmem:[#allocation2] sm:$0xff]
      %v268 = vld [vmem:[#allocation2 + $0x8] sm:$0xff]
      %v269 = vld [vmem:[%s3] sm:$0xff]
      %v270 = vld [vmem:[%s3 + $0x8] sm:$0xff]
      %v271 = vld [vmem:[%s3 + $0x10] sm:$0xff]
      %v272 = vld [vmem:[%s3 + $0x18] sm:$0xff]
      %v273 = vld [vmem:[%s3 + $0x20] sm:$0xff]
      %v274 = vld [vmem:[%s3 + $0x28] sm:$0xff]
      %v275 = vld [vmem:[%s3 + $0x30] sm:$0xff]
      %v276 = vld [vmem:[%s3 + $0x38] sm:$0xff]
      %v277 = vld [vmem:[%s3 + $0x40] sm:$0xff]
      %v278 = vld [vmem:[%s3 + $0x48] sm:$0xff]
      %v279 = vld [vmem:[%s3 + $0x50] sm:$0xff]
      %v280 = vld [vmem:[%s3 + $0x58] sm:$0xff]
      %v281 = vld [vmem:[%s3 + $0x60] sm:$0xff]
      %v282 = vld [vmem:[%s3 + $0x68] sm:$0xff]
      %v283 = vld [vmem:[%s3 + $0x70] sm:$0xff]
      %v284 = vld [vmem:[%s3 + $0x78] sm:$0xff]
      %v285 = vld [vmem:[#allocation2 + $0x1] sm:$0xff]
      %v286 = vld [vmem:[#allocation2 + $0x9] sm:$0xff]
      %s287 = scalar_lea.vmem %s3, 128
      %v288 = vld [vmem:[%s287] sm:$0xff]
      %v289 = vld [vmem:[%s287 + $0x8] sm:$0xff]
      %v290 = vld [vmem:[%s287 + $0x10] sm:$0xff]
      %v291 = vld [vmem:[%s287 + $0x18] sm:$0xff]
      %v292 = vld [vmem:[%s287 + $0x20] sm:$0xff]
      %v293 = vld [vmem:[%s287 + $0x28] sm:$0xff]
      %v294 = vld [vmem:[%s287 + $0x30] sm:$0xff]
      %v295 = vld [vmem:[%s287 + $0x38] sm:$0xff]
      %v296 = vld [vmem:[%s287 + $0x40] sm:$0xff]
      %v297 = vld [vmem:[%s287 + $0x48] sm:$0xff]
      %v298 = vld [vmem:[%s287 + $0x50] sm:$0xff]
      %v299 = vld [vmem:[%s287 + $0x58] sm:$0xff]
      %v300 = vld [vmem:[%s287 + $0x60] sm:$0xff]
      %v301 = vld [vmem:[%s287 + $0x68] sm:$0xff]
      %v302 = vld [vmem:[%s287 + $0x70] sm:$0xff]
      %v303 = vld [vmem:[%s287 + $0x78] sm:$0xff]
      %304 = vmatpush.msra.mxu0 %v303
      %305 = vmatpush.msra.mxu0 %v302
      %306 = vmatpush.msra.mxu0 %v301
      %307 = vmatpush.msra.mxu0 %v300
      %308 = vmatpush.msra.mxu0 %v299
      %309 = vmatpush.msra.mxu0 %v298
      %310 = vmatpush.msra.mxu0 %v297
      %311 = vmatpush.msra.mxu0 %v296
      %312 = vmatpush.msra.mxu0 %v295
      %313 = vmatpush.msra.mxu0 %v294
      %314 = vmatpush.msra.mxu0 %v293
      %315 = vmatpush.msra.mxu0 %v292
      %316 = vmatpush.msra.mxu0 %v291
      %317 = vmatpush.msra.mxu0 %v290
      %318 = vmatpush.msra.mxu0 %v289
      %319 = vmatpush.msra.mxu0 %v288
      %320 = vmatmul.f32.gmra.mxu0 %v285
      %v321 = vpop.f32.mrf.mxu0
      %v322 = vadd.f32 0.0, %v321
      %323 = vmatmul.f32.gmra.mxu0 %v286
      %v324 = vpop.f32.mrf.mxu0
      %v325 = vadd.f32 0.0, %v324
      %326 = vdwg.mxu0
      %327 = vmatpush.msra.mxu0 %v284
      %328 = vmatpush.msra.mxu0 %v283
      %329 = vmatpush.msra.mxu0 %v282
      %330 = vmatpush.msra.mxu0 %v281
      %331 = vmatpush.msra.mxu0 %v280
      %332 = vmatpush.msra.mxu0 %v279
      %333 = vmatpush.msra.mxu0 %v278
      %334 = vmatpush.msra.mxu0 %v277
      %335 = vmatpush.msra.mxu0 %v276
      %336 = vmatpush.msra.mxu0 %v275
      %337 = vmatpush.msra.mxu0 %v274
      %338 = vmatpush.msra.mxu0 %v273
      %339 = vmatpush.msra.mxu0 %v272
      %340 = vmatpush.msra.mxu0 %v271
      %341 = vmatpush.msra.mxu0 %v270
      %342 = vmatpush.msra.mxu0 %v269
      %343 = vmatmul.f32.gmra.mxu0 %v267
      %v344 = vpop.f32.mrf.mxu0
      %v345 = vadd.f32 %v322, %v344
      %346 = vmatmul.f32.gmra.mxu0 %v268
      %v347 = vpop.f32.mrf.mxu0
      %v348 = vadd.f32 %v325, %v347
      %349 = vdwg.mxu0
      %v350 = vld [vmem:[#allocation2 + $0x2] sm:$0xff]
      %v351 = vld [vmem:[#allocation2 + $0xa] sm:$0xff]
      %s352 = scalar_lea.vmem %s3, 256
      %v353 = vld [vmem:[%s352] sm:$0xff]
      %v354 = vld [vmem:[%s352 + $0x8] sm:$0xff]
      %v355 = vld [vmem:[%s352 + $0x10] sm:$0xff]
      %v356 = vld [vmem:[%s352 + $0x18] sm:$0xff]
      %v357 = vld [vmem:[%s352 + $0x20] sm:$0xff]
      %v358 = vld [vmem:[%s352 + $0x28] sm:$0xff]
      %v359 = vld [vmem:[%s352 + $0x30] sm:$0xff]
      %v360 = vld [vmem:[%s352 + $0x38] sm:$0xff]
      %v361 = vld [vmem:[%s352 + $0x40] sm:$0xff]
      %v362 = vld [vmem:[%s352 + $0x48] sm:$0xff]
      %v363 = vld [vmem:[%s352 + $0x50] sm:$0xff]
      %v364 = vld [vmem:[%s352 + $0x58] sm:$0xff]
      %v365 = vld [vmem:[%s352 + $0x60] sm:$0xff]
      %v366 = vld [vmem:[%s352 + $0x68] sm:$0xff]
      %v367 = vld [vmem:[%s352 + $0x70] sm:$0xff]
      %v368 = vld [vmem:[%s352 + $0x78] sm:$0xff]
      %369 = vmatpush.msra.mxu0 %v368
      %370 = vmatpush.msra.mxu0 %v367
      %371 = vmatpush.msra.mxu0 %v366
      %372 = vmatpush.msra.mxu0 %v365
      %373 = vmatpush.msra.mxu0 %v364
      %374 = vmatpush.msra.mxu0 %v363
      %375 = vmatpush.msra.mxu0 %v362
      %376 = vmatpush.msra.mxu0 %v361
      %377 = vmatpush.msra.mxu0 %v360
      %378 = vmatpush.msra.mxu0 %v359
      %379 = vmatpush.msra.mxu0 %v358
      %380 = vmatpush.msra.mxu0 %v357
      %381 = vmatpush.msra.mxu0 %v356
      %382 = vmatpush.msra.mxu0 %v355
      %383 = vmatpush.msra.mxu0 %v354
      %384 = vmatpush.msra.mxu0 %v353
      %385 = vmatmul.f32.gmra.mxu0 %v350
      %v386 = vpop.f32.mrf.mxu0
      %v387 = vadd.f32 0.0, %v386
      %388 = vmatmul.f32.gmra.mxu0 %v351
      %v389 = vpop.f32.mrf.mxu0
      %v390 = vadd.f32 0.0, %v389
      %391 = vdwg.mxu0
      %v392 = vadd.f32 %v345, %v387
      %v393 = vadd.f32 %v348, %v390
      %394 = vst [vmem:[%s246] sm:$0xff] %v392
      %395 = vst [vmem:[%s246 + $0x8] sm:$0xff] %v393
      %vm396 = vcmask 130048
      %v398 = vsel %vm396, 1.0, 0
      %400 = vmatpush.msra.mxu0 0.0
      %401 = vmatpush.msra.mxu0 0.0
      %402 = vmatpush.msra.mxu0 0.0
      %403 = vmatpush.msra.mxu0 0.0
      %404 = vmatpush.msra.mxu0 0.0
      %405 = vmatpush.msra.mxu0 0.0
      %406 = vmatpush.msra.mxu0 0.0
      %407 = vmatpush.msra.mxu0 0.0
      %408 = vmatpush.msra.mxu0 0.0
      %409 = vmatpush.msra.mxu0 0.0
      %410 = vmatpush.msra.mxu0 0.0
      %411 = vmatpush.msra.mxu0 0.0
      %412 = vmatpush.msra.mxu0 0.0
      %413 = vmatpush.msra.mxu0 0.0
      %414 = vmatpush.msra.mxu0 %v393
      %415 = vmatpush.msra.mxu0 %v392
      %416 = vmatmul.f32.gmra.mxu0 %v398
      %v417 = vpop.f32.mrf.mxu0
      %v418 = vadd.f32 0.0, %v417
      %419 = vdwg.mxu0
      %v420 = vmul.f32 %v392, %v392
      %v421 = vmul.f32 %v393, %v393
      %422 = vmatpush.msra.mxu0 0.0
      %423 = vmatpush.msra.mxu0 0.0
      %424 = vmatpush.msra.mxu0 0.0
      %425 = vmatpush.msra.mxu0 0.0
      %426 = vmatpush.msra.mxu0 0.0
      %427 = vmatpush.msra.mxu0 0.0
      %428 = vmatpush.msra.mxu0 0.0
      %429 = vmatpush.msra.mxu0 0.0
      %430 = vmatpush.msra.mxu0 0.0
      %431 = vmatpush.msra.mxu0 0.0
      %432 = vmatpush.msra.mxu0 0.0
      %433 = vmatpush.msra.mxu0 0.0
      %434 = vmatpush.msra.mxu0 0.0
      %435 = vmatpush.msra.mxu0 0.0
      %436 = vmatpush.msra.mxu0 %v421
      %437 = vmatpush.msra.mxu0 %v420
      %438 = vmatmul.f32.gmra.mxu0 %v398
      %v439 = vpop.f32.mrf.mxu0
      %v440 = vadd.f32 0.0, %v439
      %441 = vdwg.mxu0
      %p442 = scmp.eq.s32.totalorder %s18, 0
      // Predicated region
      $region37: #{residual_block_2d.4} parent=35 // pred_check
        %p443 = pneg %p442
      $region38: #{residual_block_2d.4} parent=35 // pred_check_branch
        %445 = sbr.rel (%p443) target = $region40
      $region39: #{residual_block_2d.4} parent=35 // pred_region
        %446 = vst [vmem:[%s5] sm:$0x1] 0.0
        %447 = vst [vmem:[%s6] sm:$0x1] 0.0
      $region40: #{residual_block_2d.4} parent=35 // pred_fallthru
        _
      %v448 = vld [vmem:[%s5] sm:$0x1]
      %v449 = vadd.f32 %v448, %v418
      %450 = vst [vmem:[%s5] sm:$0x1] %v449
      %v451 = vld [vmem:[%s6] sm:$0x1]
      %v452 = vadd.f32 %v451, %v440
      %453 = vst [vmem:[%s6] sm:$0x1] %v452
      %p454 = scmp.lt.s32.totalorder %s18, 1
      %s455 = scalar_select %p454, %s18, 1
      %s456 = smul.addr %s455, 2
      %s457 = smul.addr %s456, 8
      %s458 = scalar_lea.vmem %s4, %s457
      // Predicated region
      $region41: #{residual_block_2d.4} parent=35 // pred_check
        %p459 = pneg %p125
      $region42: #{residual_block_2d.4} parent=35 // pred_check_branch
        %461 = sbr.rel (%p459) target = $region44
      $region43: #{residual_block_2d.4} parent=35 // pred_region
        _
      $region44: #{residual_block_2d.4} parent=35 // pred_fallthru
        _
      // Predicated region
      $region45: #{residual_block_2d.4} parent=35 // pred_check
        %p462 = pneg %p146
      $region46: #{residual_block_2d.4} parent=35 // pred_check_branch
        %464 = sbr.rel (%p462) target = $region48
      $region47: #{residual_block_2d.4} parent=35 // pred_region
        _
      $region48: #{residual_block_2d.4} parent=35 // pred_fallthru
        _
      // Predicated region
      $region49: #{residual_block_2d.4} parent=35 // pred_check
        %p465 = pneg %p167
      $region50: #{residual_block_2d.4} parent=35 // pred_check_branch
        %467 = sbr.rel (%p465) target = $region52
      $region51: #{residual_block_2d.4} parent=35 // pred_region
        _
      $region52: #{residual_block_2d.4} parent=35 // pred_fallthru
        _
      // Predicated region
      $region53: #{residual_block_2d.4} parent=35 // pred_check
        %p468 = pneg %p146
      $region54: #{residual_block_2d.4} parent=35 // pred_check_branch
        %470 = sbr.rel (%p468) target = $region56
      $region55: #{residual_block_2d.4} parent=35 // pred_region
        _
      $region56: #{residual_block_2d.4} parent=35 // pred_fallthru
        _
      // Predicated region
      $region57: #{residual_block_2d.4} parent=35 // pred_check
        %p471 = pneg %p167
      $region58: #{residual_block_2d.4} parent=35 // pred_check_branch
        %473 = sbr.rel (%p471) target = $region60
      $region59: #{residual_block_2d.4} parent=35 // pred_region
        _
      $region60: #{residual_block_2d.4} parent=35 // pred_fallthru
        _
    $region36: #{residual_block_2d.4} parent=5 // pred_fallthru
      _
    %p474 = scmp.le.s32.totalorder 2, %s13
    // Predicated region
    $region61: #{residual_block_2d.4} parent=5 // pred_check
      %p475 = pneg %p474
    $region62: #{residual_block_2d.4} parent=5 // pred_check_branch
      %477 = sbr.rel (%p475) target = $region64
    $region63: #{residual_block_2d.4} parent=5 // pred_region
      %s478 = ssub.s32 %s13, 2
      // Predicated region
      $region65: #{residual_block_2d.4} parent=63 // pred_check
        %p479 = pneg %p131
      $region66: #{residual_block_2d.4} parent=63 // pred_check_branch
        %481 = sbr.rel (%p479) target = $region68
      $region67: #{residual_block_2d.4} parent=63 // pred_region
        %p482 = scmp.lt.s32.totalorder %s19, 1
        %s483 = scalar_select %p482, %s19, 1
        %s484 = smul.addr %s483, 2
        %s485 = smul.addr %s484, 8
        %s486 = scalar_lea.vmem %s4, %s485
      $region68: #{residual_block_2d.4} parent=63 // pred_fallthru
        _
    $region64: #{residual_block_2d.4} parent=5 // pred_fallthru
      _
  $region6: #{residual_block_2d.4} parent=0 // loop_footer
    %s17 = sadd.s32 1, %s13
  $region7: #{residual_block_2d.4} parent=0 // loop_footer_branch
    %12 = sbr.rel target = $region3
  $region8: #{residual_block_2d.4} parent=0 // loop_exit
    _

// kernel: residual_block_2d.5
$region0: #{residual_block_2d.5}
  #allocation0 [shape = 'u32[]', space=smem, size = 0x4, offset = 0x4, fixed_abs, tag = 'smem constant byte address 0x4 - core index']
  #allocation1 [shape = 'u32[72,128]{1,0:T(1,128)}', space=vmem, size = 0x9000, scoped, tag = 'internal scratch']
  %s0 = inlined_call_operand.vmem [shape: f32[2,16,128], index: 0, kind: input, shape index: {}]
  %s1 = inlined_call_operand.vmem [shape: f32[1,128], index: 1, kind: input, shape index: {}]
  %s2 = inlined_call_operand.vmem [shape: f32[1,128], index: 2, kind: input, shape index: {}]
  %s3 = inlined_call_operand.vmem [shape: f32[2,16,64], index: 3, kind: input, shape index: {}]
  %s4 = inlined_call_operand.vmem [shape: f32[64,128], index: 4, kind: input, shape index: {}]
  %s5 = inlined_call_operand.vmem [shape: f32[1,128], index: 5, kind: input, shape index: {}]
  %s6 = inlined_call_operand.vmem [shape: f32[2,16,128], index: 6, kind: output, shape index: {}]
  %s7 = sld [smem:[#allocation0]]
  $region57: #{residual_block_2d.5} parent=0
    _
  %s9 = ssub.s32 1, %s7
  %s10 = scalar_select 0, %s9, %s7
  loop: start=0, step=1, limit=4
  $region2: #{residual_block_2d.5} parent=0 // loop_pre_header
    _
  $region3: #{residual_block_2d.5} parent=0 // loop_header
    %s12 = sphi 0, %s16
    %p13 = scmp.ge.s32.totalorder %s12, 4
    %s22 = sphi 0, %s24
    %s25 = sphi 0, %s22
    %s26 = sphi 0, %s25
    %s42 = sphi 0, %s26
    %s46 = sphi 0, %s46
    %s48 = sphi 0, %s46
    %s49 = sphi 0, %s48
    %s63 = sphi 0, %s49
    %s67 = sphi 0, %s67
    %s69 = sphi 0, %s67
    %s70 = sphi 0, %s69
    %s84 = sphi 0, %s70
    %s90 = sphi 0, %s92
    %s93 = sphi 0, %s90
    %s94 = sphi 0, %s93
    %s110 = sphi 0, %s94
    %s114 = sphi 0, %s114
    %s116 = sphi 0, %s114
    %s117 = sphi 0, %s116
    %s131 = sphi 0, %s117
    %s135 = sphi 0, %s135
    %s137 = sphi 0, %s135
    %s138 = sphi 0, %s137
    %s152 = sphi 0, %s138
    %s158 = sphi 0, %s160
    %s161 = sphi 0, %s158
    %s162 = sphi 0, %s161
    %s178 = sphi 0, %s162
  $region4: #{residual_block_2d.5} parent=0 // loop_header_branch
    %15 = sbr.rel (%p13) target = $region8
  $region5: #{residual_block_2d.5} parent=0 // loop_body
    %s17 = ssub.s32 %s12, 1
    %s18 = ssub.s32 %s12, 2
    %s19 = sadd.s32 %s12, 1
    %s20 = ssub.s32 %s12, %s19
    %p21 = scmp.eq.s32.totalorder %s20, 0
    %s23 = sadd.s32 %s22, 1
    %s24 = scalar_select %p21, %s22, %s23
    %p27 = pneg %p21
    %p28 = scmp.eq.s32.totalorder %s12, 1
    %p29 = por %p27, %p28
    %p30 = scmp.ne.s32.totalorder %s22, %s25
    %p31 = scmp.eq.s32.totalorder %s12, 0
    %p32 = por %p30, %p31
    %p33 = scmp.ne.s32.totalorder %s22, %s25
    %p34 = scmp.eq.s32.totalorder %s17, 1
    %p35 = por %p33, %p34
    %p36 = scmp.ne.s32.totalorder %s25, %s26
    %p37 = scmp.eq.s32.totalorder %s17, 0
    %p38 = por %p36, %p37
    %p39 = scmp.ne.s32.totalorder %s25, %s26
    %p40 = scmp.eq.s32.totalorder %s18, 1
    %p41 = por %p39, %p40
    %p43 = scmp.ne.s32.totalorder %s26, %s42
    %p44 = scmp.eq.s32.totalorder %s18, 0
    %p45 = por %p43, %p44
    %s47 = sadd.s32 %s46, 1
    %p50 = scmp.eq.s32.totalorder %s12, 1
    %p51 = scmp.ne.s32.totalorder %s46, %s48
    %p52 = scmp.eq.s32.totalorder %s12, 0
    %p53 = por %p51, %p52
    %p54 = scmp.ne.s32.totalorder %s46, %s48
    %p55 = scmp.eq.s32.totalorder %s17, 1
    %p56 = por %p54, %p55
    %p57 = scmp.ne.s32.totalorder %s48, %s49
    %p58 = scmp.eq.s32.totalorder %s17, 0
    %p59 = por %p57, %p58
    %p60 = scmp.ne.s32.totalorder %s48, %s49
    %p61 = scmp.eq.s32.totalorder %s18, 1
    %p62 = por %p60, %p61
    %p64 = scmp.ne.s32.totalorder %s49, %s63
    %p65 = scmp.eq.s32.totalorder %s18, 0
    %p66 = por %p64, %p65
    %s68 = sadd.s32 %s67, 1
    %p71 = scmp.eq.s32.totalorder %s12, 1
    %p72 = scmp.ne.s32.totalorder %s67, %s69
    %p73 = scmp.eq.s32.totalorder %s12, 0
    %p74 = por %p72, %p73
    %p75 = scmp.ne.s32.totalorder %s67, %s69
    %p76 = scmp.eq.s32.totalorder %s17, 1
    %p77 = por %p75, %p76
    %p78 = scmp.ne.s32.totalorder %s69, %s70
    %p79 = scmp.eq.s32.totalorder %s17, 0
    %p80 = por %p78, %p79
    %p81 = scmp.ne.s32.totalorder %s69, %s70
    %p82 = scmp.eq.s32.totalorder %s18, 1
    %p83 = por %p81, %p82
    %p85 = scmp.ne.s32.totalorder %s70, %s84
    %p86 = scmp.eq.s32.totalorder %s18, 0
    %p87 = por %p85, %p86
    %s88 = ssub.s32 %s12, %s19
    %p89 = scmp.eq.s32.totalorder %s88, 0
    %s91 = sadd.s32 %s90, 1
    %s92 = scalar_select %p89, %s90, %s91
    %p95 = pneg %p89
    %p96 = scmp.eq.s32.totalorder %s12, 1
    %p97 = por %p95, %p96
    %p98 = scmp.ne.s32.totalorder %s90, %s93
    %p99 = scmp.eq.s32.totalorder %s12, 0
    %p100 = por %p98, %p99
    %p101 = scmp.ne.s32.totalorder %s90, %s93
    %p102 = scmp.eq.s32.totalorder %s17, 1
    %p103 = por %p101, %p102
    %p104 = scmp.ne.s32.totalorder %s93, %s94
    %p105 = scmp.eq.s32.totalorder %s17, 0
    %p106 = por %p104, %p105
    %p107 = scmp.ne.s32.totalorder %s93, %s94
    %p108 = scmp.eq.s32.totalorder %s18, 1
    %p109 = por %p107, %p108
    %p111 = scmp.ne.s32.totalorder %s94, %s110
    %p112 = scmp.eq.s32.totalorder %s18, 0
    %p113 = por %p111, %p112
    %s115 = sadd.s32 %s114, 1
    %p118 = scmp.eq.s32.totalorder %s12, 1
    %p119 = scmp.ne.s32.totalorder %s114, %s116
    %p120 = scmp.eq.s32.totalorder %s12, 0
    %p121 = por %p119, %p120
    %p122 = scmp.ne.s32.totalorder %s114, %s116
    %p123 = scmp.eq.s32.totalorder %s17, 1
    %p124 = por %p122, %p123
    %p125 = scmp.ne.s32.totalorder %s116, %s117
    %p126 = scmp.eq.s32.totalorder %s17, 0
    %p127 = por %p125, %p126
    %p128 = scmp.ne.s32.totalorder %s116, %s117
    %p129 = scmp.eq.s32.totalorder %s18, 1
    %p130 = por %p128, %p129
    %p132 = scmp.ne.s32.totalorder %s117, %s131
    %p133 = scmp.eq.s32.totalorder %s18, 0
    %p134 = por %p132, %p133
    %s136 = sadd.s32 %s135, 1
    %p139 = scmp.eq.s32.totalorder %s12, 1
    %p140 = scmp.ne.s32.totalorder %s135, %s137
    %p141 = scmp.eq.s32.totalorder %s12, 0
    %p142 = por %p140, %p141
    %p143 = scmp.ne.s32.totalorder %s135, %s137
    %p144 = scmp.eq.s32.totalorder %s17, 1
    %p145 = por %p143, %p144
    %p146 = scmp.ne.s32.totalorder %s137, %s138
    %p147 = scmp.eq.s32.totalorder %s17, 0
    %p148 = por %p146, %p147
    %p149 = scmp.ne.s32.totalorder %s137, %s138
    %p150 = scmp.eq.s32.totalorder %s18, 1
    %p151 = por %p149, %p150
    %p153 = scmp.ne.s32.totalorder %s138, %s152
    %p154 = scmp.eq.s32.totalorder %s18, 0
    %p155 = por %p153, %p154
    %s156 = ssub.s32 %s12, %s19
    %p157 = scmp.eq.s32.totalorder %s156, 0
    %s159 = sadd.s32 %s158, 1
    %s160 = scalar_select %p157, %s158, %s159
    %p163 = pneg %p157
    %p164 = scmp.eq.s32.totalorder %s12, 1
    %p165 = por %p163, %p164
    %p166 = scmp.ne.s32.totalorder %s158, %s161
    %p167 = scmp.eq.s32.totalorder %s12, 0
    %p168 = por %p166, %p167
    %p169 = scmp.ne.s32.totalorder %s158, %s161
    %p170 = scmp.eq.s32.totalorder %s17, 1
    %p171 = por %p169, %p170
    %p172 = scmp.ne.s32.totalorder %s161, %s162
    %p173 = scmp.eq.s32.totalorder %s17, 0
    %p174 = por %p172, %p173
    %p175 = scmp.ne.s32.totalorder %s161, %s162
    %p176 = scmp.eq.s32.totalorder %s18, 1
    %p177 = por %p175, %p176
    %p179 = scmp.ne.s32.totalorder %s162, %s178
    %p180 = scmp.eq.s32.totalorder %s18, 0
    %p181 = por %p179, %p180
    %p182 = scmp.le.s32.totalorder 1, %s12
    %p183 = scmp.lt.s32.totalorder %s12, 3
    %p184 = pnand %p182, %p183
    %p185 = pneg %p184
    // Predicated region
    $region9: #{residual_block_2d.5} parent=5 // pred_check
      _
    $region10: #{residual_block_2d.5} parent=5 // pred_check_branch
      %187 = sbr.rel (%p184) target = $region12
    $region11: #{residual_block_2d.5} parent=5 // pred_region
      %s188 = ssub.s32 %s12, 1
      // Predicated region
      $region13: #{residual_block_2d.5} parent=11 // pred_check
        %p189 = pneg %p59
      $region14: #{residual_block_2d.5} parent=11 // pred_check_branch
        %191 = sbr.rel (%p189) target = $region16
      $region15: #{residual_block_2d.5} parent=11 // pred_region
        _
      $region16: #{residual_block_2d.5} parent=11 // pred_fallthru
        _
      // Predicated region
      $region17: #{residual_block_2d.5} parent=11 // pred_check
        %p192 = pneg %p80
      $region18: #{residual_block_2d.5} parent=11 // pred_check_branch
        %194 = sbr.rel (%p192) target = $region20
      $region19: #{residual_block_2d.5} parent=11 // pred_region
        _
      $region20: #{residual_block_2d.5} parent=11 // pred_fallthru
        _
      // Predicated region
      $region21: #{residual_block_2d.5} parent=11 // pred_check
        %p195 = pneg %p127
      $region22: #{residual_block_2d.5} parent=11 // pred_check_branch
        %197 = sbr.rel (%p195) target = $region24
      $region23: #{residual_block_2d.5} parent=11 // pred_region
        _
      $region24: #{residual_block_2d.5} parent=11 // pred_fallthru
        _
      // Predicated region
      $region25: #{residual_block_2d.5} parent=11 // pred_check
        %p198 = pneg %p148
      $region26: #{residual_block_2d.5} parent=11 // pred_check_branch
        %200 = sbr.rel (%p198) target = $region28
      $region27: #{residual_block_2d.5} parent=11 // pred_region
        _
      $region28: #{residual_block_2d.5} parent=11 // pred_fallthru
        _
    $region12: #{residual_block_2d.5} parent=5 // pred_fallthru
      _
    %p201 = scmp.lt.s32.totalorder %s12, 2
    // Predicated region
    $region29: #{residual_block_2d.5} parent=5 // pred_check
      %p202 = pneg %p201
    $region30: #{residual_block_2d.5} parent=5 // pred_check_branch
      %204 = sbr.rel (%p202) target = $region32
    $region31: #{residual_block_2d.5} parent=5 // pred_region
      // Predicated region
      $region33: #{residual_block_2d.5} parent=31 // pred_check
        %p205 = pneg %p32
      $region34: #{residual_block_2d.5} parent=31 // pred_check_branch
        %207 = sbr.rel (%p205) target = $region36
      $region35: #{residual_block_2d.5} parent=31 // pred_region
        %p208 = scmp.lt.s32.totalorder %s12, 1
        %s209 = scalar_select %p208, %s12, 1
        %s210 = smul.addr %s209, 2
        %s211 = smul.addr %s210, 8
        %s212 = scalar_lea.vmem %s0, %s211
      $region36: #{residual_block_2d.5} parent=31 // pred_fallthru
        _
      // Predicated region
      $region37: #{residual_block_2d.5} parent=31 // pred_check
        %p213 = pneg %p100
      $region38: #{residual_block_2d.5} parent=31 // pred_check_branch
        %215 = sbr.rel (%p213) target = $region40
      $region39: #{residual_block_2d.5} parent=31 // pred_region
        %p216 = scmp.lt.s32.totalorder %s12, 1
        %s217 = scalar_select %p216, %s12, 1
        %s218 = smul.addr %s217, 2
        %s219 = smul.addr %s218, 8
        %s220 = scalar_lea.vmem %s3, %s219
      $region40: #{residual_block_2d.5} parent=31 // pred_fallthru
        _
    $region32: #{residual_block_2d.5} parent=5 // pred_fallthru
      _
    %p221 = scmp.le.s32.totalorder 1, %s12
    %p222 = scmp.lt.s32.totalorder %s12, 3
    %p223 = pnand %p221, %p222
    %p224 = pneg %p223
    // Predicated region
    $region41: #{residual_block_2d.5} parent=5 // pred_check
      _
    $region42: #{residual_block_2d.5} parent=5 // pred_check_branch
      %226 = sbr.rel (%p223) target = $region44
    $region43: #{residual_block_2d.5} parent=5 // pred_region
      %s227 = ssub.s32 %s12, 1
      %p228 = scmp.lt.s32.totalorder %s17, 1
      %s229 = scalar_select %p228, %s17, 1
      %s230 = smul.addr %s229, 2
      %s231 = smul.addr %s230, 8
      %s232 = scalar_lea.vmem %s0, %s231
      %p233 = pneg %p38
      %p234 = pneg %p35
      %p235 = pneg %p59
      %p236 = pneg %p56
      %p237 = pneg %p80
      %p238 = pneg %p77
      %p239 = scmp.lt.s32.totalorder %s17, 1
      %s240 = scalar_select %p239, %s17, 1
      %s241 = smul.addr %s240, 2
      %s242 = smul.addr %s241, 8
      %s243 = scalar_lea.vmem %s3, %s242
      %p244 = pneg %p106
      %p245 = pneg %p103
      %p246 = pneg %p127
      %p247 = pneg %p124
      %p248 = pneg %p148
      %p249 = pneg %p145
      %p250 = pneg %p174
      %p251 = pneg %p171
      %p252 = scmp.lt.s32.totalorder %s17, 1
      %s253 = scalar_select %p252, %s17, 1
      %s254 = smul.addr %s253, 2
      %s255 = smul.addr %s254, 8
      %s256 = scalar_lea.vmem %s6, %s255
      %p257 = scmp.lt.s32.totalorder %s17, 1
      %s258 = scalar_select %p257, %s17, 1
      %s259 = smul.addr %s258, 2
      %s260 = smul.addr %s259, 8
      %s261 = scalar_lea.vmem %s0, %s260
      %p262 = scmp.lt.s32.totalorder %s17, 1
      %s263 = scalar_select %p262, %s17, 1
      %s264 = smul.addr %s263, 2
      %s265 = smul.addr %s264, 8
      %s266 = scalar_lea.vmem %s3, %s265
      %p267 = scmp.lt.s32.totalorder %s17, 1
      %s268 = scalar_select %p267, %s17, 1
      %s269 = smul.addr %s268, 2
      %s270 = smul.addr %s269, 8
      %s271 = scalar_lea.vmem %s6, %s270
      %v272 = vld [vmem:[%s261] sm:$0xff]
      %v273 = vld [vmem:[%s261 + $0x8] sm:$0xff]
      %v274 = vld [vmem:[%s1] sm:$0x1]
      %v276 = vperm.slane %v274, 0
      %v278 = vmul.f32 %v272, %v276
      %v279 = vmul.f32 %v273, %v276
      %v280 = vld [vmem:[%s2] sm:$0x1]
      %v282 = vperm.slane %v280, 0
      %v284 = vadd.f32 %v278, %v282
      %v285 = vadd.f32 %v279, %v282
      %v286 = vmax.f32 %v284, 0.0
      %v287 = vmax.f32 %v285, 0.0
      %v288 = vld [vmem:[%s266] sm:$0xff]
      %v289 = vld [vmem:[%s266 + $0x8] sm:$0xff]
      %v290 = vld [vmem:[%s4] sm:$0xff]
      %v291 = vld [vmem:[%s4 + $0x8] sm:$0xff]
      %v292 = vld [vmem:[%s4 + $0x10] sm:$0xff]
      %v293 = vld [vmem:[%s4 + $0x18] sm:$0xff]
      %v294 = vld [vmem:[%s4 + $0x20] sm:$0xff]
      %v295 = vld [vmem:[%s4 + $0x28] sm:$0xff]
      %v296 = vld [vmem:[%s4 + $0x30] sm:$0xff]
      %v297 = vld [vmem:[%s4 + $0x38] sm:$0xff]
      %vm298 = vcmask 523264
      %v300 = vsel %vm298, %v288, 0
      %v303 = vsel %vm298, %v289, 0
      %305 = vmatpush.msra.mxu0 0.0
      %306 = vmatpush.msra.mxu0 0.0
      %307 = vmatpush.msra.mxu0 0.0
      %308 = vmatpush.msra.mxu0 0.0
      %309 = vmatpush.msra.mxu0 0.0
      %310 = vmatpush.msra.mxu0 0.0
      %311 = vmatpush.msra.mxu0 0.0
      %312 = vmatpush.msra.mxu0 0.0
      %313 = vmatpush.msra.mxu0 %v297
      %314 = vmatpush.msra.mxu0 %v296
      %315 = vmatpush.msra.mxu0 %v295
      %316 = vmatpush.msra.mxu0 %v294
      %317 = vmatpush.msra.mxu0 %v293
      %318 = vmatpush.msra.mxu0 %v292
      %319 = vmatpush.msra.mxu0 %v291
      %320 = vmatpush.msra.mxu0 %v290
      %321 = vmatmul.f32.gmra.mxu0 %v300
      %v322 = vpop.f32.mrf.mxu0
      %v323 = vadd.f32 0.0, %v322
      %324 = vmatmul.f32.gmra.mxu0 %v303
      %v325 = vpop.f32.mrf.mxu0
      %v326 = vadd.f32 0.0, %v325
      %327 = vdwg.mxu0
      %v328 = vadd.f32 %v286, %v323
      %v329 = vadd.f32 %v287, %v326
      %v330 = vld [vmem:[%s5] sm:$0x1]
      %v332 = vperm.slane %v330, 0
      %v334 = vadd.f32 %v328, %v332
      %v335 = vadd.f32 %v329, %v332
      %336 = vst [vmem:[%s271] sm:$0xff] %v334
      %337 = vst [vmem:[%s271 + $0x8] sm:$0xff] %v335
      %p338 = scmp.lt.s32.totalorder %s17, 1
      %s339 = scalar_select %p338, %s17, 1
      %s340 = smul.addr %s339, 2
      %s341 = smul.addr %s340, 8
      %s342 = scalar_lea.vmem %s6, %s341
      // Predicated region
      $region45: #{residual_block_2d.5} parent=43 // pred_check
        %p343 = pneg %p171
      $region46: #{residual_block_2d.5} parent=43 // pred_check_branch
        %345 = sbr.rel (%p343) target = $region48
      $region47: #{residual_block_2d.5} parent=43 // pred_region
        _
      $region48: #{residual_block_2d.5} parent=43 // pred_fallthru
        _
    $region44: #{residual_block_2d.5} parent=5 // pred_fallthru
      _
    %p346 = scmp.le.s32.totalorder 2, %s12
    // Predicated region
    $region49: #{residual_block_2d.5} parent=5 // pred_check
      %p347 = pneg %p346
    $region50: #{residual_block_2d.5} parent=5 // pred_check_branch
      %349 = sbr.rel (%p347) target = $region52
    $region51: #{residual_block_2d.5} parent=5 // pred_region
      %s350 = ssub.s32 %s12, 2
      // Predicated region
      $region53: #{residual_block_2d.5} parent=51 // pred_check
        %p351 = pneg %p177
      $region54: #{residual_block_2d.5} parent=51 // pred_check_branch
        %353 = sbr.rel (%p351) target = $region56
      $region55: #{residual_block_2d.5} parent=51 // pred_region
        %p354 = scmp.lt.s32.totalorder %s18, 1
        %s355 = scalar_select %p354, %s18, 1
        %s356 = smul.addr %s355, 2
        %s357 = smul.addr %s356, 8
        %s358 = scalar_lea.vmem %s6, %s357
      $region56: #{residual_block_2d.5} parent=51 // pred_fallthru
        _
    $region52: #{residual_block_2d.5} parent=5 // pred_fallthru
      _
  $region6: #{residual_block_2d.5} parent=0 // loop_footer
    %s16 = sadd.s32 1, %s12
  $region7: #{residual_block_2d.5} parent=0 // loop_footer_branch
    %11 = sbr.rel target = $region3
  $region8: #{residual_block_2d.5} parent=0 // loop_exit
    _

</llo_original>
